<compile_context>
chip_gen: v5e
topology: v5e:2x2
jax: 0.10.0
libtpu: 0.0.40
codegen_flags: <defaults>
</compile_context>

<pallas_src>
import math

import jax
import jax.numpy as jnp
import numpy as np
from jax import lax
from jax.experimental import pallas as pl
from jax.experimental.pallas import tpu as pltpu

# ----- small synthetic CLIP text-tower config -----
B = 2          # number of prompts (batch)
N = 8          # context length (seq)
D = 32         # transformer width
H = 4          # attention heads
DH = D // H    # head dim
L = 2          # transformer layers
FF = 4 * D     # MLP hidden dim
E = 16         # text embedding dim (text_projection output)
LN_EPS = 1e-5


def _layernorm(x, w, b):
    mu = jnp.mean(x, axis=-1, keepdims=True)
    var = jnp.mean((x - mu) ** 2, axis=-1, keepdims=True)
    return (x - mu) * lax.rsqrt(var + LN_EPS) * w + b


# =======================  fused transformer + head kernel  =======================
def transformer_kernel(prompts_ref, pos_ref, mask_ref, onehot_ref,
                       ln1_w_ref, ln1_b_ref, wqkv_ref, bqkv_ref, wo_ref, bo_ref,
                       ln2_w_ref, ln2_b_ref, w1_ref, b1_ref, w2_ref, b2_ref,
                       lnf_w_ref, lnf_b_ref, proj_ref,
                       out_ref, x_sc):
    layer = pl.program_id(0)

    @pl.when(layer == 0)
    def _():
        # x = prompts + positional_embedding   (the (N,B,D) permutes in torch are layout-only)
        x_sc[...] = prompts_ref[...] + pos_ref[...]

    x = x_sc[...]                                   # (B, N, D) f32
    mask = mask_ref[...]                            # (N, N)  0 / -inf, grid-resident

    # ---------------- attention block (pre-LN, causal MHA) ----------------
    xn = _layernorm(x, ln1_w_ref[...], ln1_b_ref[...])
    qkv = (jnp.dot(xn.reshape(B * N, D).astype(jnp.bfloat16), wqkv_ref[...],
                   preferred_element_type=jnp.float32)
           + bqkv_ref[...])                         # (B*N, 3D) f32
    qkv = qkv.reshape(B, N, 3 * D)
    q = qkv[:, :, 0 * D:1 * D]
    k = qkv[:, :, 1 * D:2 * D]
    v = qkv[:, :, 2 * D:3 * D]

    scale = 1.0 / math.sqrt(DH)
    heads = []
    for h in range(H):                              # head outputs stay in registers
        sl = slice(h * DH, (h + 1) * DH)
        qh = q[:, :, sl].astype(jnp.bfloat16)       # (B, N, DH)
        kh = k[:, :, sl].astype(jnp.bfloat16)
        vh = v[:, :, sl].astype(jnp.bfloat16)
        s = jnp.einsum("bqd,bkd->bqk", qh, kh,
                       preferred_element_type=jnp.float32) * scale + mask
        s = s - jnp.max(s, axis=-1, keepdims=True)  # safe: diagonal is never masked
        pw = jnp.exp(s)
        # exact division (matches reference numerics; approx reciprocal cost the
        # correctness check ~4e-2 relative error on a couple of outputs)
        pw = pw / jnp.sum(pw, axis=-1, keepdims=True)
        heads.append(jnp.einsum("bqk,bkd->bqd", pw.astype(jnp.bfloat16), vh,
                                preferred_element_type=jnp.float32))
    attn = jnp.concatenate(heads, axis=-1)          # (B, N, D) f32

    attn_out = (jnp.dot(attn.reshape(B * N, D).astype(jnp.bfloat16), wo_ref[...],
                        preferred_element_type=jnp.float32)
                + bo_ref[...]).reshape(B, N, D)
    x = x + attn_out

    # ---------------- MLP block (QuickGELU, as in CLIP) ----------------
    xn2 = _layernorm(x, ln2_w_ref[...], ln2_b_ref[...])
    h1 = (jnp.dot(xn2.reshape(B * N, D).astype(jnp.bfloat16), w1_ref[...],
                  preferred_element_type=jnp.float32) + b1_ref[...])      # (B*N, FF) f32
    h1 = h1 * jax.nn.sigmoid(1.702 * h1)                                  # QuickGELU in f32
    h2 = (jnp.dot(h1.astype(jnp.bfloat16), w2_ref[...],
                  preferred_element_type=jnp.float32) + b2_ref[...]).reshape(B, N, D)
    x = x + h2

    x_sc[...] = x

    # ------------- fused head: EOT gather + ln_final + text_projection -------------
    @pl.when(layer == pl.num_programs(0) - 1)
    def _():
        onehot = onehot_ref[...]                    # (B, N) one-hot at EOT position
        rows = [jnp.dot(onehot[b:b + 1, :], x[b],
                        preferred_element_type=jnp.float32) for b in range(B)]
        x_eot = jnp.concatenate(rows, axis=0)       # (B, D) exact gather via one-hot matmul
        xe = _layernorm(x_eot, lnf_w_ref[...], lnf_b_ref[...])
        out_ref[...] = jnp.dot(xe.astype(jnp.bfloat16), proj_ref[...],
                               preferred_element_type=jnp.float32).astype(out_ref.dtype)


# =======================  wrapper  =======================
def text_encoder_forward(prompts, tokenized_prompts, p):
    # cheap host-side glue: EOT position -> one-hot selector, and the causal mask
    eot_onehot = jax.nn.one_hot(jnp.argmax(tokenized_prompts, axis=-1), N,
                                dtype=jnp.float32)                          # (B, N)
    causal = jnp.where(jnp.arange(N)[None, :] <= jnp.arange(N)[:, None],
                       0.0, -jnp.inf).astype(jnp.float32)                   # (N, N)

    def res(shape):
        # grid-resident block: same block index for every layer -> DMA'd once
        return pl.BlockSpec(shape, lambda l, _n=len(shape): (0,) * _n)

    def per_layer(shape):
        # per-layer weight slab; leading layer dim squeezed out of the kernel Ref
        return pl.BlockSpec((pl.Squeezed(),) + shape,
                            lambda l, _n=len(shape): (l,) + (0,) * _n)

    kernel = pl.pallas_call(
        transformer_kernel,
        out_shape=jax.ShapeDtypeStruct((B, E), jnp.float32),
        grid_spec=pltpu.PrefetchScalarGridSpec(
            num_scalar_prefetch=0,
            grid=(L,),                               # batch fully blocked; layers only
            in_specs=[
                res((B, N, D)),          # prompts
                res((N, D)),             # positional embedding
                res((N, N)),             # causal mask (hoisted, resident)
                res((B, N)),             # EOT one-hot selector
                per_layer((1, D)),       # ln1 weight
                per_layer((1, D)),       # ln1 bias
                per_layer((D, 3 * D)),   # qkv weight (bf16)
                per_layer((1, 3 * D)),   # qkv bias
                per_layer((D, D)),       # out-proj weight (bf16)
                per_layer((1, D)),       # out-proj bias
                per_layer((1, D)),       # ln2 weight
                per_layer((1, D)),       # ln2 bias
                per_layer((D, FF)),      # mlp fc1 weight (bf16)
                per_layer((1, FF)),      # mlp fc1 bias
                per_layer((FF, D)),      # mlp fc2 weight (bf16)
                per_layer((1, D)),       # mlp fc2 bias
                res((1, D)),             # ln_final weight
                res((1, D)),             # ln_final bias
                res((D, E)),             # text_projection (bf16)
            ],
            out_specs=pl.BlockSpec((B, E), lambda l: (0, 0)),
            scratch_shapes=[pltpu.VMEM((B, N, D), jnp.float32)],   # running hidden state
        ),
        compiler_params=pltpu.CompilerParams(
            dimension_semantics=("arbitrary",)),     # layer axis is a sequential carry
    )
    return kernel(prompts, p["pos"], causal, eot_onehot,
                  p["ln1_w"], p["ln1_b"], p["wqkv"], p["bqkv"], p["wo"], p["bo"],
                  p["ln2_w"], p["ln2_b"], p["w1"], p["b1"], p["w2"], p["b2"],
                  p["lnf_w"], p["lnf_b"], p["proj"])


# =======================  pure-JAX reference (same bf16 matmul boundaries)  =======================
def reference_forward(prompts, tokenized_prompts, p):
    bf16 = jnp.bfloat16
    x = prompts + p["pos"]
    causal = jnp.where(jnp.arange(N)[None, :] <= jnp.arange(N)[:, None], 0.0, -jnp.inf)
    scale = 1.0 / math.sqrt(DH)
    for l in range(L):
        xn = _layernorm(x, p["ln1_w"][l], p["ln1_b"][l])
        qkv = jnp.dot(xn.astype(bf16), p["wqkv"][l],
                      preferred_element_type=jnp.float32) + p["bqkv"][l]
        q, k, v = qkv[..., :D], qkv[..., D:2 * D], qkv[..., 2 * D:]
        split = lambda t: t.reshape(B, N, H, DH).transpose(0, 2, 1, 3).astype(bf16)
        qh, kh, vh = split(q), split(k), split(v)
        s = jnp.einsum("bhnd,bhmd->bhnm", qh, kh,
                       preferred_element_type=jnp.float32) * scale + causal
        s = s - jnp.max(s, axis=-1, keepdims=True)
        pw = jnp.exp(s)
        pw = pw / jnp.sum(pw, axis=-1, keepdims=True)
        o = jnp.einsum("bhnm,bhmd->bhnd", pw.astype(bf16), vh,
                       preferred_element_type=jnp.float32)
        o = o.transpose(0, 2, 1, 3).reshape(B, N, D)
        x = x + (jnp.dot(o.astype(bf16), p["wo"][l],
                         preferred_element_type=jnp.float32) + p["bo"][l])
        xn2 = _layernorm(x, p["ln2_w"][l], p["ln2_b"][l])
        h1 = jnp.dot(xn2.astype(bf16), p["w1"][l],
                     preferred_element_type=jnp.float32) + p["b1"][l]
        h1 = h1 * jax.nn.sigmoid(1.702 * h1)
        x = x + (jnp.dot(h1.astype(bf16), p["w2"][l],
                         preferred_element_type=jnp.float32) + p["b2"][l])
    eot = jnp.argmax(tokenized_prompts, axis=-1)
    x_eot = x[jnp.arange(B), eot]
    xe = _layernorm(x_eot, p["lnf_w"], p["lnf_b"])
    return jnp.dot(xe.astype(bf16), p["proj"], preferred_element_type=jnp.float32)


# =======================  deterministic parameter init  =======================
def init_params(key):
    ks = jax.random.split(key, 16)
    nrm = lambda k, shape, s: jax.random.normal(k, shape, jnp.float32) * s
    bf16 = jnp.bfloat16
    return dict(
        pos=nrm(ks[0], (N, D), 0.01),
        ln1_w=1.0 + nrm(ks[1], (L, 1, D), 0.05),
        ln1_b=nrm(ks[2], (L, 1, D), 0.05),
        wqkv=nrm(ks[3], (L, D, 3 * D), D ** -0.5).astype(bf16),
        bqkv=nrm(ks[4], (L, 1, 3 * D), 0.02),
        wo=nrm(ks[5], (L, D, D), D ** -0.5).astype(bf16),
        bo=nrm(ks[6], (L, 1, D), 0.02),
        ln2_w=1.0 + nrm(ks[7], (L, 1, D), 0.05),
        ln2_b=nrm(ks[8], (L, 1, D), 0.05),
        w1=nrm(ks[9], (L, D, FF), D ** -0.5).astype(bf16),
        b1=nrm(ks[10], (L, 1, FF), 0.02),
        w2=nrm(ks[11], (L, FF, D), FF ** -0.5).astype(bf16),
        b2=nrm(ks[12], (L, 1, D), 0.02),
        lnf_w=1.0 + nrm(ks[13], (1, D), 0.05),
        lnf_b=nrm(ks[14], (1, D), 0.05),
        proj=nrm(ks[15], (D, E), D ** -0.5).astype(bf16),
    )


if __name__ == "__main__":
    key = jax.random.PRNGKey(0)
    kp, kt, kparam = jax.random.split(key, 3)

    prompts = jax.random.normal(kp, (B, N, D), jnp.float32) * 0.1
    # tokenized prompts: EOT token (largest id) at a distinct position per prompt
    tokenized = jax.random.randint(kt, (B, N), 1, 100)
    eot_pos = jnp.array([5, N - 1], dtype=jnp.int32)
    tokenized = tokenized.at[jnp.arange(B), eot_pos].set(49407)

    params = init_params(kparam)

    out = text_encoder_forward(prompts, tokenized, params)
    out = jax.block_until_ready(out)

    ref = reference_forward(prompts, tokenized, params)
    # kernel and reference share identical bf16 matmul boundaries and exact softmax
    # division, so the residual mismatch is pure f32 rounding / reduction order.
    np.testing.assert_allclose(np.asarray(out), np.asarray(ref), atol=5e-3, rtol=5e-3)

    print("KERNEL_OK")
</pallas_src>

<mosaic_0001>
module attributes {stable_mosaic.version = 11 : i64} {
  func.func @transformer_kernel(%arg0: i32, %arg1: memref<2x8x32xf32, #tpu.memory_space<vmem>>, %arg2: memref<8x32xf32, #tpu.memory_space<vmem>>, %arg3: memref<8x8xf32, #tpu.memory_space<vmem>>, %arg4: memref<2x8xf32, #tpu.memory_space<vmem>>, %arg5: memref<1x1x32xf32, #tpu.memory_space<vmem>>, %arg6: memref<1x1x32xf32, #tpu.memory_space<vmem>>, %arg7: memref<1x32x96xbf16, #tpu.memory_space<vmem>>, %arg8: memref<1x1x96xf32, #tpu.memory_space<vmem>>, %arg9: memref<1x32x32xbf16, #tpu.memory_space<vmem>>, %arg10: memref<1x1x32xf32, #tpu.memory_space<vmem>>, %arg11: memref<1x1x32xf32, #tpu.memory_space<vmem>>, %arg12: memref<1x1x32xf32, #tpu.memory_space<vmem>>, %arg13: memref<1x32x128xbf16, #tpu.memory_space<vmem>>, %arg14: memref<1x1x128xf32, #tpu.memory_space<vmem>>, %arg15: memref<1x128x32xbf16, #tpu.memory_space<vmem>>, %arg16: memref<1x1x32xf32, #tpu.memory_space<vmem>>, %arg17: memref<1x32xf32, #tpu.memory_space<vmem>>, %arg18: memref<1x32xf32, #tpu.memory_space<vmem>>, %arg19: memref<32x16xbf16, #tpu.memory_space<vmem>>, %arg20: memref<2x16xf32, #tpu.memory_space<vmem>>, %arg21: memref<2x8x32xf32, #tpu.memory_space<vmem>>) attributes {dimension_semantics = [#tpu.dimension_semantics<arbitrary>], iteration_bounds = array<i64: 2>, scalar_prefetch = 0 : i64, scratch_operands = 1 : i64, tpu.core_type = #tpu.core_type<tc>, window_params = [{pipeline_mode = #tpu.pipeline_mode<synchronous>, transform_indices = @transform_0, window_bounds = array<i64: 2, 8, 32>}, {pipeline_mode = #tpu.pipeline_mode<synchronous>, transform_indices = @transform_1, window_bounds = array<i64: 8, 32>}, {pipeline_mode = #tpu.pipeline_mode<synchronous>, transform_indices = @transform_2, window_bounds = array<i64: 8, 8>}, {pipeline_mode = #tpu.pipeline_mode<synchronous>, transform_indices = @transform_3, window_bounds = array<i64: 2, 8>}, {transform_indices = @transform_4, window_bounds = array<i64: 1, 1, 32>}, {transform_indices = @transform_5, window_bounds = array<i64: 1, 1, 32>}, {transform_indices = @transform_6, window_bounds = array<i64: 1, 32, 96>}, {transform_indices = @transform_7, window_bounds = array<i64: 1, 1, 96>}, {transform_indices = @transform_8, window_bounds = array<i64: 1, 32, 32>}, {transform_indices = @transform_9, window_bounds = array<i64: 1, 1, 32>}, {transform_indices = @transform_10, window_bounds = array<i64: 1, 1, 32>}, {transform_indices = @transform_11, window_bounds = array<i64: 1, 1, 32>}, {transform_indices = @transform_12, window_bounds = array<i64: 1, 32, 128>}, {transform_indices = @transform_13, window_bounds = array<i64: 1, 1, 128>}, {transform_indices = @transform_14, window_bounds = array<i64: 1, 128, 32>}, {transform_indices = @transform_15, window_bounds = array<i64: 1, 1, 32>}, {pipeline_mode = #tpu.pipeline_mode<synchronous>, transform_indices = @transform_16, window_bounds = array<i64: 1, 32>}, {pipeline_mode = #tpu.pipeline_mode<synchronous>, transform_indices = @transform_17, window_bounds = array<i64: 1, 32>}, {pipeline_mode = #tpu.pipeline_mode<synchronous>, transform_indices = @transform_18, window_bounds = array<i64: 32, 16>}, {pipeline_mode = #tpu.pipeline_mode<synchronous>, transform_indices = @transform_19, window_bounds = array<i64: 2, 16>}]} {
    %c0_i32 = arith.constant 0 : i32
    %0 = arith.cmpi eq, %arg0, %c0_i32 : i32
    %1 = arith.extui %0 : i1 to i32
    %c0_i32_0 = arith.constant 0 : i32
    %2 = arith.cmpi ne, %1, %c0_i32_0 : i32
    scf.if %2 {
      %c0_80 = arith.constant 0 : index
      %c0_81 = arith.constant 0 : index
      %c0_82 = arith.constant 0 : index
      %209 = vector.load %arg1[%c0_80, %c0_81, %c0_82] : memref<2x8x32xf32, #tpu.memory_space<vmem>>, vector<2x8x32xf32>
      %c0_83 = arith.constant 0 : index
      %c0_84 = arith.constant 0 : index
      %210 = vector.load %arg2[%c0_83, %c0_84] : memref<8x32xf32, #tpu.memory_space<vmem>>, vector<8x32xf32>
      %211 = vector.shape_cast %210 : vector<8x32xf32> to vector<1x8x32xf32>
      %212 = vector.broadcast %211 : vector<1x8x32xf32> to vector<2x8x32xf32>
      %213 = arith.addf %209, %212 : vector<2x8x32xf32>
      %c0_85 = arith.constant 0 : index
      %c0_86 = arith.constant 0 : index
      %c0_87 = arith.constant 0 : index
      %214 = vector.load %arg21[%c0_85, %c0_86, %c0_87] : memref<2x8x32xf32, #tpu.memory_space<vmem>>, vector<2x8x32xf32>
      tpu.vector_store %arg21[%c0_85, %c0_86, %c0_87], %213 {strides = array<i32>} : memref<2x8x32xf32, #tpu.memory_space<vmem>>, vector<2x8x32xf32>,
    } else {
    }
    %c0 = arith.constant 0 : index
    %c0_1 = arith.constant 0 : index
    %c0_2 = arith.constant 0 : index
    %3 = vector.load %arg21[%c0, %c0_1, %c0_2] : memref<2x8x32xf32, #tpu.memory_space<vmem>>, vector<2x8x32xf32>
    %c0_3 = arith.constant 0 : index
    %c0_4 = arith.constant 0 : index
    %4 = vector.load %arg3[%c0_3, %c0_4] : memref<8x8xf32, #tpu.memory_space<vmem>>, vector<8x8xf32>
    %c0_5 = arith.constant 0 : index
    %c0_6 = arith.constant 0 : index
    %c0_7 = arith.constant 0 : index
    %5 = vector.load %arg5[%c0_5, %c0_6, %c0_7] : memref<1x1x32xf32, #tpu.memory_space<vmem>>, vector<1x1x32xf32>
    %6 = vector.shape_cast %5 : vector<1x1x32xf32> to vector<1x32xf32>
    %c0_8 = arith.constant 0 : index
    %c0_9 = arith.constant 0 : index
    %c0_10 = arith.constant 0 : index
    %7 = vector.load %arg6[%c0_8, %c0_9, %c0_10] : memref<1x1x32xf32, #tpu.memory_space<vmem>>, vector<1x1x32xf32>
    %8 = vector.shape_cast %7 : vector<1x1x32xf32> to vector<1x32xf32>
    %cst = arith.constant dense<0.000000e+00> : vector<2x8xf32>
    %9 = vector.multi_reduction <add>, %3, %cst [2] : vector<2x8x32xf32> to vector<2x8xf32>
    %10 = vector.shape_cast %9 : vector<2x8xf32> to vector<2x8x1xf32>
    %cst_11 = arith.constant 3.200000e+01 : f32
    %11 = vector.broadcast %cst_11 : f32 to vector<2x8x1xf32>
    %12 = arith.divf %10, %11 : vector<2x8x1xf32>
    %13 = vector.broadcast %12 : vector<2x8x1xf32> to vector<2x8x32xf32>
    %14 = arith.subf %3, %13 : vector<2x8x32xf32>
    %15 = arith.mulf %14, %14 : vector<2x8x32xf32>
    %cst_12 = arith.constant dense<0.000000e+00> : vector<2x8xf32>
    %16 = vector.multi_reduction <add>, %15, %cst_12 [2] : vector<2x8x32xf32> to vector<2x8xf32>
    %17 = vector.shape_cast %16 : vector<2x8xf32> to vector<2x8x1xf32>
    %cst_13 = arith.constant 3.200000e+01 : f32
    %18 = vector.broadcast %cst_13 : f32 to vector<2x8x1xf32>
    %19 = arith.divf %17, %18 : vector<2x8x1xf32>
    %20 = vector.broadcast %12 : vector<2x8x1xf32> to vector<2x8x32xf32>
    %21 = arith.subf %3, %20 : vector<2x8x32xf32>
    %cst_14 = arith.constant 9.99999974E-6 : f32
    %22 = vector.broadcast %cst_14 : f32 to vector<2x8x1xf32>
    %23 = arith.addf %19, %22 : vector<2x8x1xf32>
    %24 = math.rsqrt %23 : vector<2x8x1xf32>
    %25 = vector.broadcast %24 : vector<2x8x1xf32> to vector<2x8x32xf32>
    %26 = arith.mulf %21, %25 : vector<2x8x32xf32>
    %27 = vector.shape_cast %6 : vector<1x32xf32> to vector<1x1x32xf32>
    %28 = vector.broadcast %27 : vector<1x1x32xf32> to vector<2x8x32xf32>
    %29 = arith.mulf %26, %28 : vector<2x8x32xf32>
    %30 = vector.shape_cast %8 : vector<1x32xf32> to vector<1x1x32xf32>
    %31 = vector.broadcast %30 : vector<1x1x32xf32> to vector<2x8x32xf32>
    %32 = arith.addf %29, %31 : vector<2x8x32xf32>
    %33 = vector.shape_cast %32 : vector<2x8x32xf32> to vector<16x32xf32>
    %34 = arith.truncf %33 : vector<16x32xf32> to vector<16x32xbf16>
    %c0_15 = arith.constant 0 : index
    %c0_16 = arith.constant 0 : index
    %c0_17 = arith.constant 0 : index
    %35 = vector.load %arg7[%c0_15, %c0_16, %c0_17] : memref<1x32x96xbf16, #tpu.memory_space<vmem>>, vector<1x32x96xbf16>
    %36 = vector.shape_cast %35 : vector<1x32x96xbf16> to vector<32x96xbf16>
    %cst_18 = arith.constant dense<0.000000e+00> : vector<16x96xf32>
    %37 = tpu.matmul %34, %36, %cst_18 {dimension_numbers = #tpu.dot_dimension_numbers<[1], [0], [0], [1], [0, 0, 1, 1], [], []>} : vector<16x32xbf16>, vector<32x96xbf16>, vector<16x96xf32> -> vector<16x96xf32>
    %c0_19 = arith.constant 0 : index
    %c0_20 = arith.constant 0 : index
    %c0_21 = arith.constant 0 : index
    %38 = vector.load %arg8[%c0_19, %c0_20, %c0_21] : memref<1x1x96xf32, #tpu.memory_space<vmem>>, vector<1x1x96xf32>
    %39 = vector.shape_cast %38 : vector<1x1x96xf32> to vector<1x96xf32>
    %40 = vector.broadcast %39 : vector<1x96xf32> to vector<16x96xf32>
    %41 = arith.addf %37, %40 : vector<16x96xf32>
    %42 = vector.shape_cast %41 : vector<16x96xf32> to vector<2x8x96xf32>
    %43 = vector.extract_strided_slice %42 {offsets = [0, 0, 0], sizes = [2, 8, 32], strides = [1, 1, 1]} : vector<2x8x96xf32> to vector<2x8x32xf32>
    %44 = vector.extract_strided_slice %42 {offsets = [0, 0, 32], sizes = [2, 8, 32], strides = [1, 1, 1]} : vector<2x8x96xf32> to vector<2x8x32xf32>
    %45 = vector.extract_strided_slice %42 {offsets = [0, 0, 64], sizes = [2, 8, 32], strides = [1, 1, 1]} : vector<2x8x96xf32> to vector<2x8x32xf32>
    %46 = vector.extract_strided_slice %43 {offsets = [0, 0, 0], sizes = [2, 8, 8], strides = [1, 1, 1]} : vector<2x8x32xf32> to vector<2x8x8xf32>
    %47 = arith.truncf %46 : vector<2x8x8xf32> to vector<2x8x8xbf16>
    %48 = vector.extract_strided_slice %44 {offsets = [0, 0, 0], sizes = [2, 8, 8], strides = [1, 1, 1]} : vector<2x8x32xf32> to vector<2x8x8xf32>
    %49 = arith.truncf %48 : vector<2x8x8xf32> to vector<2x8x8xbf16>
    %50 = vector.extract_strided_slice %45 {offsets = [0, 0, 0], sizes = [2, 8, 8], strides = [1, 1, 1]} : vector<2x8x32xf32> to vector<2x8x8xf32>
    %51 = arith.truncf %50 : vector<2x8x8xf32> to vector<2x8x8xbf16>
    "tpu.trace_start"() <{level = 10 : i32, message = "bqd,bkd->bqk"}> : () -> ()
    %cst_22 = arith.constant dense<0.000000e+00> : vector<2x8x8xf32>
    %52 = tpu.matmul %47, %49, %cst_22 {dimension_numbers = #tpu.dot_dimension_numbers<[2], [2], [1], [1], [0, 0, 0, 1, 1, 1], [0], [0]>} : vector<2x8x8xbf16>, vector<2x8x8xbf16>, vector<2x8x8xf32> -> vector<2x8x8xf32>
    "tpu.trace_stop"() : () -> ()
    %cst_23 = arith.constant 0.353553385 : f32
    %53 = vector.broadcast %cst_23 : f32 to vector<2x8x8xf32>
    %54 = arith.mulf %52, %53 : vector<2x8x8xf32>
    %55 = vector.shape_cast %4 : vector<8x8xf32> to vector<1x8x8xf32>
    %56 = vector.broadcast %55 : vector<1x8x8xf32> to vector<2x8x8xf32>
    %57 = arith.addf %54, %56 : vector<2x8x8xf32>
    %cst_24 = arith.constant dense<0xFF800000> : vector<2x8xf32>
    %58 = vector.multi_reduction <maximumf>, %57, %cst_24 [2] : vector<2x8x8xf32> to vector<2x8xf32>
    %59 = vector.shape_cast %58 : vector<2x8xf32> to vector<2x8x1xf32>
    %60 = vector.broadcast %59 : vector<2x8x1xf32> to vector<2x8x8xf32>
    %61 = arith.subf %57, %60 : vector<2x8x8xf32>
    %62 = math.exp %61 : vector<2x8x8xf32>
    %cst_25 = arith.constant dense<0.000000e+00> : vector<2x8xf32>
    %63 = vector.multi_reduction <add>, %62, %cst_25 [2] : vector<2x8x8xf32> to vector<2x8xf32>
    %64 = vector.shape_cast %63 : vector<2x8xf32> to vector<2x8x1xf32>
    %65 = vector.broadcast %64 : vector<2x8x1xf32> to vector<2x8x8xf32>
    %66 = arith.divf %62, %65 : vector<2x8x8xf32>
    %67 = arith.truncf %66 : vector<2x8x8xf32> to vector<2x8x8xbf16>
    "tpu.trace_start"() <{level = 10 : i32, message = "bqk,bkd->bqd"}> : () -> ()
    %cst_26 = arith.constant dense<0.000000e+00> : vector<2x8x8xf32>
    %68 = tpu.matmul %67, %51, %cst_26 {dimension_numbers = #tpu.dot_dimension_numbers<[2], [1], [1], [2], [0, 0, 0, 1, 1, 2], [0], [0]>} : vector<2x8x8xbf16>, vector<2x8x8xbf16>, vector<2x8x8xf32> -> vector<2x8x8xf32>
    "tpu.trace_stop"() : () -> ()
    %69 = vector.extract_strided_slice %43 {offsets = [0, 0, 8], sizes = [2, 8, 8], strides = [1, 1, 1]} : vector<2x8x32xf32> to vector<2x8x8xf32>
    %70 = arith.truncf %69 : vector<2x8x8xf32> to vector<2x8x8xbf16>
    %71 = vector.extract_strided_slice %44 {offsets = [0, 0, 8], sizes = [2, 8, 8], strides = [1, 1, 1]} : vector<2x8x32xf32> to vector<2x8x8xf32>
    %72 = arith.truncf %71 : vector<2x8x8xf32> to vector<2x8x8xbf16>
    %73 = vector.extract_strided_slice %45 {offsets = [0, 0, 8], sizes = [2, 8, 8], strides = [1, 1, 1]} : vector<2x8x32xf32> to vector<2x8x8xf32>
    %74 = arith.truncf %73 : vector<2x8x8xf32> to vector<2x8x8xbf16>
    "tpu.trace_start"() <{level = 10 : i32, message = "bqd,bkd->bqk"}> : () -> ()
    %cst_27 = arith.constant dense<0.000000e+00> : vector<2x8x8xf32>
    %75 = tpu.matmul %70, %72, %cst_27 {dimension_numbers = #tpu.dot_dimension_numbers<[2], [2], [1], [1], [0, 0, 0, 1, 1, 1], [0], [0]>} : vector<2x8x8xbf16>, vector<2x8x8xbf16>, vector<2x8x8xf32> -> vector<2x8x8xf32>
    "tpu.trace_stop"() : () -> ()
    %cst_28 = arith.constant 0.353553385 : f32
    %76 = vector.broadcast %cst_28 : f32 to vector<2x8x8xf32>
    %77 = arith.mulf %75, %76 : vector<2x8x8xf32>
    %78 = vector.shape_cast %4 : vector<8x8xf32> to vector<1x8x8xf32>
    %79 = vector.broadcast %78 : vector<1x8x8xf32> to vector<2x8x8xf32>
    %80 = arith.addf %77, %79 : vector<2x8x8xf32>
    %cst_29 = arith.constant dense<0xFF800000> : vector<2x8xf32>
    %81 = vector.multi_reduction <maximumf>, %80, %cst_29 [2] : vector<2x8x8xf32> to vector<2x8xf32>
    %82 = vector.shape_cast %81 : vector<2x8xf32> to vector<2x8x1xf32>
    %83 = vector.broadcast %82 : vector<2x8x1xf32> to vector<2x8x8xf32>
    %84 = arith.subf %80, %83 : vector<2x8x8xf32>
    %85 = math.exp %84 : vector<2x8x8xf32>
    %cst_30 = arith.constant dense<0.000000e+00> : vector<2x8xf32>
    %86 = vector.multi_reduction <add>, %85, %cst_30 [2] : vector<2x8x8xf32> to vector<2x8xf32>
    %87 = vector.shape_cast %86 : vector<2x8xf32> to vector<2x8x1xf32>
    %88 = vector.broadcast %87 : vector<2x8x1xf32> to vector<2x8x8xf32>
    %89 = arith.divf %85, %88 : vector<2x8x8xf32>
    %90 = arith.truncf %89 : vector<2x8x8xf32> to vector<2x8x8xbf16>
    "tpu.trace_start"() <{level = 10 : i32, message = "bqk,bkd->bqd"}> : () -> ()
    %cst_31 = arith.constant dense<0.000000e+00> : vector<2x8x8xf32>
    %91 = tpu.matmul %90, %74, %cst_31 {dimension_numbers = #tpu.dot_dimension_numbers<[2], [1], [1], [2], [0, 0, 0, 1, 1, 2], [0], [0]>} : vector<2x8x8xbf16>, vector<2x8x8xbf16>, vector<2x8x8xf32> -> vector<2x8x8xf32>
    "tpu.trace_stop"() : () -> ()
    %92 = vector.extract_strided_slice %43 {offsets = [0, 0, 16], sizes = [2, 8, 8], strides = [1, 1, 1]} : vector<2x8x32xf32> to vector<2x8x8xf32>
    %93 = arith.truncf %92 : vector<2x8x8xf32> to vector<2x8x8xbf16>
    %94 = vector.extract_strided_slice %44 {offsets = [0, 0, 16], sizes = [2, 8, 8], strides = [1, 1, 1]} : vector<2x8x32xf32> to vector<2x8x8xf32>
    %95 = arith.truncf %94 : vector<2x8x8xf32> to vector<2x8x8xbf16>
    %96 = vector.extract_strided_slice %45 {offsets = [0, 0, 16], sizes = [2, 8, 8], strides = [1, 1, 1]} : vector<2x8x32xf32> to vector<2x8x8xf32>
    %97 = arith.truncf %96 : vector<2x8x8xf32> to vector<2x8x8xbf16>
    "tpu.trace_start"() <{level = 10 : i32, message = "bqd,bkd->bqk"}> : () -> ()
    %cst_32 = arith.constant dense<0.000000e+00> : vector<2x8x8xf32>
    %98 = tpu.matmul %93, %95, %cst_32 {dimension_numbers = #tpu.dot_dimension_numbers<[2], [2], [1], [1], [0, 0, 0, 1, 1, 1], [0], [0]>} : vector<2x8x8xbf16>, vector<2x8x8xbf16>, vector<2x8x8xf32> -> vector<2x8x8xf32>
    "tpu.trace_stop"() : () -> ()
    %cst_33 = arith.constant 0.353553385 : f32
    %99 = vector.broadcast %cst_33 : f32 to vector<2x8x8xf32>
    %100 = arith.mulf %98, %99 : vector<2x8x8xf32>
    %101 = vector.shape_cast %4 : vector<8x8xf32> to vector<1x8x8xf32>
    %102 = vector.broadcast %101 : vector<1x8x8xf32> to vector<2x8x8xf32>
    %103 = arith.addf %100, %102 : vector<2x8x8xf32>
    %cst_34 = arith.constant dense<0xFF800000> : vector<2x8xf32>
    %104 = vector.multi_reduction <maximumf>, %103, %cst_34 [2] : vector<2x8x8xf32> to vector<2x8xf32>
    %105 = vector.shape_cast %104 : vector<2x8xf32> to vector<2x8x1xf32>
    %106 = vector.broadcast %105 : vector<2x8x1xf32> to vector<2x8x8xf32>
    %107 = arith.subf %103, %106 : vector<2x8x8xf32>
    %108 = math.exp %107 : vector<2x8x8xf32>
    %cst_35 = arith.constant dense<0.000000e+00> : vector<2x8xf32>
    %109 = vector.multi_reduction <add>, %108, %cst_35 [2] : vector<2x8x8xf32> to vector<2x8xf32>
    %110 = vector.shape_cast %109 : vector<2x8xf32> to vector<2x8x1xf32>
    %111 = vector.broadcast %110 : vector<2x8x1xf32> to vector<2x8x8xf32>
    %112 = arith.divf %108, %111 : vector<2x8x8xf32>
    %113 = arith.truncf %112 : vector<2x8x8xf32> to vector<2x8x8xbf16>
    "tpu.trace_start"() <{level = 10 : i32, message = "bqk,bkd->bqd"}> : () -> ()
    %cst_36 = arith.constant dense<0.000000e+00> : vector<2x8x8xf32>
    %114 = tpu.matmul %113, %97, %cst_36 {dimension_numbers = #tpu.dot_dimension_numbers<[2], [1], [1], [2], [0, 0, 0, 1, 1, 2], [0], [0]>} : vector<2x8x8xbf16>, vector<2x8x8xbf16>, vector<2x8x8xf32> -> vector<2x8x8xf32>
    "tpu.trace_stop"() : () -> ()
    %115 = vector.extract_strided_slice %43 {offsets = [0, 0, 24], sizes = [2, 8, 8], strides = [1, 1, 1]} : vector<2x8x32xf32> to vector<2x8x8xf32>
    %116 = arith.truncf %115 : vector<2x8x8xf32> to vector<2x8x8xbf16>
    %117 = vector.extract_strided_slice %44 {offsets = [0, 0, 24], sizes = [2, 8, 8], strides = [1, 1, 1]} : vector<2x8x32xf32> to vector<2x8x8xf32>
    %118 = arith.truncf %117 : vector<2x8x8xf32> to vector<2x8x8xbf16>
    %119 = vector.extract_strided_slice %45 {offsets = [0, 0, 24], sizes = [2, 8, 8], strides = [1, 1, 1]} : vector<2x8x32xf32> to vector<2x8x8xf32>
    %120 = arith.truncf %119 : vector<2x8x8xf32> to vector<2x8x8xbf16>
    "tpu.trace_start"() <{level = 10 : i32, message = "bqd,bkd->bqk"}> : () -> ()
    %cst_37 = arith.constant dense<0.000000e+00> : vector<2x8x8xf32>
    %121 = tpu.matmul %116, %118, %cst_37 {dimension_numbers = #tpu.dot_dimension_numbers<[2], [2], [1], [1], [0, 0, 0, 1, 1, 1], [0], [0]>} : vector<2x8x8xbf16>, vector<2x8x8xbf16>, vector<2x8x8xf32> -> vector<2x8x8xf32>
    "tpu.trace_stop"() : () -> ()
    %cst_38 = arith.constant 0.353553385 : f32
    %122 = vector.broadcast %cst_38 : f32 to vector<2x8x8xf32>
    %123 = arith.mulf %121, %122 : vector<2x8x8xf32>
    %124 = vector.shape_cast %4 : vector<8x8xf32> to vector<1x8x8xf32>
    %125 = vector.broadcast %124 : vector<1x8x8xf32> to vector<2x8x8xf32>
    %126 = arith.addf %123, %125 : vector<2x8x8xf32>
    %cst_39 = arith.constant dense<0xFF800000> : vector<2x8xf32>
    %127 = vector.multi_reduction <maximumf>, %126, %cst_39 [2] : vector<2x8x8xf32> to vector<2x8xf32>
    %128 = vector.shape_cast %127 : vector<2x8xf32> to vector<2x8x1xf32>
    %129 = vector.broadcast %128 : vector<2x8x1xf32> to vector<2x8x8xf32>
    %130 = arith.subf %126, %129 : vector<2x8x8xf32>
    %131 = math.exp %130 : vector<2x8x8xf32>
    %cst_40 = arith.constant dense<0.000000e+00> : vector<2x8xf32>
    %132 = vector.multi_reduction <add>, %131, %cst_40 [2] : vector<2x8x8xf32> to vector<2x8xf32>
    %133 = vector.shape_cast %132 : vector<2x8xf32> to vector<2x8x1xf32>
    %134 = vector.broadcast %133 : vector<2x8x1xf32> to vector<2x8x8xf32>
    %135 = arith.divf %131, %134 : vector<2x8x8xf32>
    %136 = arith.truncf %135 : vector<2x8x8xf32> to vector<2x8x8xbf16>
    "tpu.trace_start"() <{level = 10 : i32, message = "bqk,bkd->bqd"}> : () -> ()
    %cst_41 = arith.constant dense<0.000000e+00> : vector<2x8x8xf32>
    %137 = tpu.matmul %136, %120, %cst_41 {dimension_numbers = #tpu.dot_dimension_numbers<[2], [1], [1], [2], [0, 0, 0, 1, 1, 2], [0], [0]>} : vector<2x8x8xbf16>, vector<2x8x8xbf16>, vector<2x8x8xf32> -> vector<2x8x8xf32>
    "tpu.trace_stop"() : () -> ()
    %138 = tpu.concatenate %68, %91, %114, %137 in 2 : vector<2x8x8xf32>, vector<2x8x8xf32>, vector<2x8x8xf32>, vector<2x8x8xf32> -> vector<2x8x32xf32>
    %139 = vector.shape_cast %138 : vector<2x8x32xf32> to vector<16x32xf32>
    %140 = arith.truncf %139 : vector<16x32xf32> to vector<16x32xbf16>
    %c0_42 = arith.constant 0 : index
    %c0_43 = arith.constant 0 : index
    %c0_44 = arith.constant 0 : index
    %141 = vector.load %arg9[%c0_42, %c0_43, %c0_44] : memref<1x32x32xbf16, #tpu.memory_space<vmem>>, vector<1x32x32xbf16>
    %142 = vector.shape_cast %141 : vector<1x32x32xbf16> to vector<32x32xbf16>
    %cst_45 = arith.constant dense<0.000000e+00> : vector<16x32xf32>
    %143 = tpu.matmul %140, %142, %cst_45 {dimension_numbers = #tpu.dot_dimension_numbers<[1], [0], [0], [1], [0, 0, 1, 1], [], []>} : vector<16x32xbf16>, vector<32x32xbf16>, vector<16x32xf32> -> vector<16x32xf32>
    %c0_46 = arith.constant 0 : index
    %c0_47 = arith.constant 0 : index
    %c0_48 = arith.constant 0 : index
    %144 = vector.load %arg10[%c0_46, %c0_47, %c0_48] : memref<1x1x32xf32, #tpu.memory_space<vmem>>, vector<1x1x32xf32>
    %145 = vector.shape_cast %144 : vector<1x1x32xf32> to vector<1x32xf32>
    %146 = vector.broadcast %145 : vector<1x32xf32> to vector<16x32xf32>
    %147 = arith.addf %143, %146 : vector<16x32xf32>
    %148 = vector.shape_cast %147 : vector<16x32xf32> to vector<2x8x32xf32>
    %149 = arith.addf %3, %148 : vector<2x8x32xf32>
    %c0_49 = arith.constant 0 : index
    %c0_50 = arith.constant 0 : index
    %c0_51 = arith.constant 0 : index
    %150 = vector.load %arg11[%c0_49, %c0_50, %c0_51] : memref<1x1x32xf32, #tpu.memory_space<vmem>>, vector<1x1x32xf32>
    %151 = vector.shape_cast %150 : vector<1x1x32xf32> to vector<1x32xf32>
    %c0_52 = arith.constant 0 : index
    %c0_53 = arith.constant 0 : index
    %c0_54 = arith.constant 0 : index
    %152 = vector.load %arg12[%c0_52, %c0_53, %c0_54] : memref<1x1x32xf32, #tpu.memory_space<vmem>>, vector<1x1x32xf32>
    %153 = vector.shape_cast %152 : vector<1x1x32xf32> to vector<1x32xf32>
    %cst_55 = arith.constant dense<0.000000e+00> : vector<2x8xf32>
    %154 = vector.multi_reduction <add>, %149, %cst_55 [2] : vector<2x8x32xf32> to vector<2x8xf32>
    %155 = vector.shape_cast %154 : vector<2x8xf32> to vector<2x8x1xf32>
    %cst_56 = arith.constant 3.200000e+01 : f32
    %156 = vector.broadcast %cst_56 : f32 to vector<2x8x1xf32>
    %157 = arith.divf %155, %156 : vector<2x8x1xf32>
    %158 = vector.broadcast %157 : vector<2x8x1xf32> to vector<2x8x32xf32>
    %159 = arith.subf %149, %158 : vector<2x8x32xf32>
    %160 = arith.mulf %159, %159 : vector<2x8x32xf32>
    %cst_57 = arith.constant dense<0.000000e+00> : vector<2x8xf32>
    %161 = vector.multi_reduction <add>, %160, %cst_57 [2] : vector<2x8x32xf32> to vector<2x8xf32>
    %162 = vector.shape_cast %161 : vector<2x8xf32> to vector<2x8x1xf32>
    %cst_58 = arith.constant 3.200000e+01 : f32
    %163 = vector.broadcast %cst_58 : f32 to vector<2x8x1xf32>
    %164 = arith.divf %162, %163 : vector<2x8x1xf32>
    %165 = vector.broadcast %157 : vector<2x8x1xf32> to vector<2x8x32xf32>
    %166 = arith.subf %149, %165 : vector<2x8x32xf32>
    %cst_59 = arith.constant 9.99999974E-6 : f32
    %167 = vector.broadcast %cst_59 : f32 to vector<2x8x1xf32>
    %168 = arith.addf %164, %167 : vector<2x8x1xf32>
    %169 = math.rsqrt %168 : vector<2x8x1xf32>
    %170 = vector.broadcast %169 : vector<2x8x1xf32> to vector<2x8x32xf32>
    %171 = arith.mulf %166, %170 : vector<2x8x32xf32>
    %172 = vector.shape_cast %151 : vector<1x32xf32> to vector<1x1x32xf32>
    %173 = vector.broadcast %172 : vector<1x1x32xf32> to vector<2x8x32xf32>
    %174 = arith.mulf %171, %173 : vector<2x8x32xf32>
    %175 = vector.shape_cast %153 : vector<1x32xf32> to vector<1x1x32xf32>
    %176 = vector.broadcast %175 : vector<1x1x32xf32> to vector<2x8x32xf32>
    %177 = arith.addf %174, %176 : vector<2x8x32xf32>
    %178 = vector.shape_cast %177 : vector<2x8x32xf32> to vector<16x32xf32>
    %179 = arith.truncf %178 : vector<16x32xf32> to vector<16x32xbf16>
    %c0_60 = arith.constant 0 : index
    %c0_61 = arith.constant 0 : index
    %c0_62 = arith.constant 0 : index
    %180 = vector.load %arg13[%c0_60, %c0_61, %c0_62] : memref<1x32x128xbf16, #tpu.memory_space<vmem>>, vector<1x32x128xbf16>
    %181 = vector.shape_cast %180 : vector<1x32x128xbf16> to vector<32x128xbf16>
    %cst_63 = arith.constant dense<0.000000e+00> : vector<16x128xf32>
    %182 = tpu.matmul %179, %181, %cst_63 {dimension_numbers = #tpu.dot_dimension_numbers<[1], [0], [0], [1], [0, 0, 1, 1], [], []>} : vector<16x32xbf16>, vector<32x128xbf16>, vector<16x128xf32> -> vector<16x128xf32>
    %c0_64 = arith.constant 0 : index
    %c0_65 = arith.constant 0 : index
    %c0_66 = arith.constant 0 : index
    %183 = vector.load %arg14[%c0_64, %c0_65, %c0_66] : memref<1x1x128xf32, #tpu.memory_space<vmem>>, vector<1x1x128xf32>
    %184 = vector.shape_cast %183 : vector<1x1x128xf32> to vector<1x128xf32>
    %185 = vector.broadcast %184 : vector<1x128xf32> to vector<16x128xf32>
    %186 = arith.addf %182, %185 : vector<16x128xf32>
    %cst_67 = arith.constant 1.702000e+00 : f32
    %187 = vector.broadcast %cst_67 : f32 to vector<16x128xf32>
    %188 = arith.mulf %187, %186 : vector<16x128xf32>
    %189 = arith.negf %188 : vector<16x128xf32>
    %190 = math.exp %189 : vector<16x128xf32>
    %cst_68 = arith.constant 1.000000e+00 : f32
    %191 = vector.broadcast %cst_68 : f32 to vector<16x128xf32>
    %192 = arith.addf %191, %190 : vector<16x128xf32>
    %193 = arith.divf %191, %192 : vector<16x128xf32>
    %194 = arith.mulf %186, %193 : vector<16x128xf32>
    %195 = arith.truncf %194 : vector<16x128xf32> to vector<16x128xbf16>
    %c0_69 = arith.constant 0 : index
    %c0_70 = arith.constant 0 : index
    %c0_71 = arith.constant 0 : index
    %196 = vector.load %arg15[%c0_69, %c0_70, %c0_71] : memref<1x128x32xbf16, #tpu.memory_space<vmem>>, vector<1x128x32xbf16>
    %197 = vector.shape_cast %196 : vector<1x128x32xbf16> to vector<128x32xbf16>
    %cst_72 = arith.constant dense<0.000000e+00> : vector<16x32xf32>
    %198 = tpu.matmul %195, %197, %cst_72 {dimension_numbers = #tpu.dot_dimension_numbers<[1], [0], [0], [1], [0, 0, 1, 1], [], []>} : vector<16x128xbf16>, vector<128x32xbf16>, vector<16x32xf32> -> vector<16x32xf32>
    %c0_73 = arith.constant 0 : index
    %c0_74 = arith.constant 0 : index
    %c0_75 = arith.constant 0 : index
    %199 = vector.load %arg16[%c0_73, %c0_74, %c0_75] : memref<1x1x32xf32, #tpu.memory_space<vmem>>, vector<1x1x32xf32>
    %200 = vector.shape_cast %199 : vector<1x1x32xf32> to vector<1x32xf32>
    %201 = vector.broadcast %200 : vector<1x32xf32> to vector<16x32xf32>
    %202 = arith.addf %198, %201 : vector<16x32xf32>
    %203 = vector.shape_cast %202 : vector<16x32xf32> to vector<2x8x32xf32>
    %204 = arith.addf %149, %203 : vector<2x8x32xf32>
    %c0_76 = arith.constant 0 : index
    %c0_77 = arith.constant 0 : index
    %c0_78 = arith.constant 0 : index
    %205 = vector.load %arg21[%c0_76, %c0_77, %c0_78] : memref<2x8x32xf32, #tpu.memory_space<vmem>>, vector<2x8x32xf32>
    tpu.vector_store %arg21[%c0_76, %c0_77, %c0_78], %204 {strides = array<i32>} : memref<2x8x32xf32, #tpu.memory_space<vmem>>, vector<2x8x32xf32>,
    %c1_i32 = arith.constant 1 : i32
    %206 = arith.cmpi eq, %arg0, %c1_i32 : i32
    %207 = arith.extui %206 : i1 to i32
    %c0_i32_79 = arith.constant 0 : i32
    %208 = arith.cmpi ne, %207, %c0_i32_79 : i32
    scf.if %208 {
      %c0_80 = arith.constant 0 : index
      %c0_81 = arith.constant 0 : index
      %209 = vector.load %arg4[%c0_80, %c0_81] : memref<2x8xf32, #tpu.memory_space<vmem>>, vector<2x8xf32>
      %210 = vector.extract_strided_slice %209 {offsets = [0, 0], sizes = [1, 8], strides = [1, 1]} : vector<2x8xf32> to vector<1x8xf32>
      %211 = vector.extract_strided_slice %204 {offsets = [0, 0, 0], sizes = [1, 8, 32], strides = [1, 1, 1]} : vector<2x8x32xf32> to vector<1x8x32xf32>
      %212 = vector.shape_cast %211 : vector<1x8x32xf32> to vector<8x32xf32>
      %cst_82 = arith.constant dense<0.000000e+00> : vector<1x32xf32>
      %213 = tpu.matmul %210, %212, %cst_82 {dimension_numbers = #tpu.dot_dimension_numbers<[1], [0], [0], [1], [0, 0, 1, 1], [], []>} : vector<1x8xf32>, vector<8x32xf32>, vector<1x32xf32> -> vector<1x32xf32>
      %214 = vector.extract_strided_slice %209 {offsets = [1, 0], sizes = [1, 8], strides = [1, 1]} : vector<2x8xf32> to vector<1x8xf32>
      %215 = vector.extract_strided_slice %204 {offsets = [1, 0, 0], sizes = [1, 8, 32], strides = [1, 1, 1]} : vector<2x8x32xf32> to vector<1x8x32xf32>
      %216 = vector.shape_cast %215 : vector<1x8x32xf32> to vector<8x32xf32>
      %cst_83 = arith.constant dense<0.000000e+00> : vector<1x32xf32>
      %217 = tpu.matmul %214, %216, %cst_83 {dimension_numbers = #tpu.dot_dimension_numbers<[1], [0], [0], [1], [0, 0, 1, 1], [], []>} : vector<1x8xf32>, vector<8x32xf32>, vector<1x32xf32> -> vector<1x32xf32>
      %218 = tpu.concatenate %213, %217 in 0 : vector<1x32xf32>, vector<1x32xf32> -> vector<2x32xf32>
      %c0_84 = arith.constant 0 : index
      %c0_85 = arith.constant 0 : index
      %219 = vector.load %arg17[%c0_84, %c0_85] : memref<1x32xf32, #tpu.memory_space<vmem>>, vector<1x32xf32>
      %c0_86 = arith.constant 0 : index
      %c0_87 = arith.constant 0 : index
      %220 = vector.load %arg18[%c0_86, %c0_87] : memref<1x32xf32, #tpu.memory_space<vmem>>, vector<1x32xf32>
      %cst_88 = arith.constant dense<0.000000e+00> : vector<2xf32>
      %221 = vector.multi_reduction <add>, %218, %cst_88 [1] : vector<2x32xf32> to vector<2xf32>
      %222 = vector.shape_cast %221 : vector<2xf32> to vector<2x1xf32>
      %cst_89 = arith.constant 3.200000e+01 : f32
      %223 = vector.broadcast %cst_89 : f32 to vector<2x1xf32>
      %224 = arith.divf %222, %223 : vector<2x1xf32>
      %225 = vector.broadcast %224 : vector<2x1xf32> to vector<2x32xf32>
      %226 = arith.subf %218, %225 : vector<2x32xf32>
      %227 = arith.mulf %226, %226 : vector<2x32xf32>
      %cst_90 = arith.constant dense<0.000000e+00> : vector<2xf32>
      %228 = vector.multi_reduction <add>, %227, %cst_90 [1] : vector<2x32xf32> to vector<2xf32>
      %229 = vector.shape_cast %228 : vector<2xf32> to vector<2x1xf32>
      %cst_91 = arith.constant 3.200000e+01 : f32
      %230 = vector.broadcast %cst_91 : f32 to vector<2x1xf32>
      %231 = arith.divf %229, %230 : vector<2x1xf32>
      %232 = vector.broadcast %224 : vector<2x1xf32> to vector<2x32xf32>
      %233 = arith.subf %218, %232 : vector<2x32xf32>
      %cst_92 = arith.constant 9.99999974E-6 : f32
      %234 = vector.broadcast %cst_92 : f32 to vector<2x1xf32>
      %235 = arith.addf %231, %234 : vector<2x1xf32>
      %236 = math.rsqrt %235 : vector<2x1xf32>
      %237 = vector.broadcast %236 : vector<2x1xf32> to vector<2x32xf32>
      %238 = arith.mulf %233, %237 : vector<2x32xf32>
      %239 = vector.broadcast %219 : vector<1x32xf32> to vector<2x32xf32>
      %240 = arith.mulf %238, %239 : vector<2x32xf32>
      %241 = vector.broadcast %220 : vector<1x32xf32> to vector<2x32xf32>
      %242 = arith.addf %240, %241 : vector<2x32xf32>
      %243 = arith.truncf %242 : vector<2x32xf32> to vector<2x32xbf16>
      %c0_93 = arith.constant 0 : index
      %c0_94 = arith.constant 0 : index
      %244 = vector.load %arg19[%c0_93, %c0_94] : memref<32x16xbf16, #tpu.memory_space<vmem>>, vector<32x16xbf16>
      %cst_95 = arith.constant dense<0.000000e+00> : vector<2x16xf32>
      %245 = tpu.matmul %243, %244, %cst_95 {dimension_numbers = #tpu.dot_dimension_numbers<[1], [0], [0], [1], [0, 0, 1, 1], [], []>} : vector<2x32xbf16>, vector<32x16xbf16>, vector<2x16xf32> -> vector<2x16xf32>
      %c0_96 = arith.constant 0 : index
      %c0_97 = arith.constant 0 : index
      %246 = vector.load %arg20[%c0_96, %c0_97] : memref<2x16xf32, #tpu.memory_space<vmem>>, vector<2x16xf32>
      tpu.vector_store %arg20[%c0_96, %c0_97], %245 {strides = array<i32>} : memref<2x16xf32, #tpu.memory_space<vmem>>, vector<2x16xf32>,
    } else {
    }
    return
  }
  func.func @transform_0(%arg0: i32) -> (i32, i32, i32) {
    %c0_i32 = arith.constant 0 : i32
    %c0_i32_0 = arith.constant 0 : i32
    %c0_i32_1 = arith.constant 0 : i32
    %c0_i32_2 = arith.constant 0 : i32
    return %c0_i32, %c0_i32_0, %c0_i32_1 : i32, i32, i32
  }
  func.func @transform_1(%arg0: i32) -> (i32, i32) {
    %c0_i32 = arith.constant 0 : i32
    %c0_i32_0 = arith.constant 0 : i32
    %c0_i32_1 = arith.constant 0 : i32
    return %c0_i32, %c0_i32_0 : i32, i32
  }
  func.func @transform_2(%arg0: i32) -> (i32, i32) {
    %c0_i32 = arith.constant 0 : i32
    %c0_i32_0 = arith.constant 0 : i32
    %c0_i32_1 = arith.constant 0 : i32
    return %c0_i32, %c0_i32_0 : i32, i32
  }
  func.func @transform_3(%arg0: i32) -> (i32, i32) {
    %c0_i32 = arith.constant 0 : i32
    %c0_i32_0 = arith.constant 0 : i32
    %c0_i32_1 = arith.constant 0 : i32
    return %c0_i32, %c0_i32_0 : i32, i32
  }
  func.func @transform_4(%arg0: i32) -> (i32, i32, i32) {
    %c0_i32 = arith.constant 0 : i32
    %c0_i32_0 = arith.constant 0 : i32
    %c0_i32_1 = arith.constant 0 : i32
    return %arg0, %c0_i32, %c0_i32_0 : i32, i32, i32
  }
  func.func @transform_5(%arg0: i32) -> (i32, i32, i32) {
    %c0_i32 = arith.constant 0 : i32
    %c0_i32_0 = arith.constant 0 : i32
    %c0_i32_1 = arith.constant 0 : i32
    return %arg0, %c0_i32, %c0_i32_0 : i32, i32, i32
  }
  func.func @transform_6(%arg0: i32) -> (i32, i32, i32) {
    %c0_i32 = arith.constant 0 : i32
    %c0_i32_0 = arith.constant 0 : i32
    %c0_i32_1 = arith.constant 0 : i32
    return %arg0, %c0_i32, %c0_i32_0 : i32, i32, i32
  }
  func.func @transform_7(%arg0: i32) -> (i32, i32, i32) {
    %c0_i32 = arith.constant 0 : i32
    %c0_i32_0 = arith.constant 0 : i32
    %c0_i32_1 = arith.constant 0 : i32
    return %arg0, %c0_i32, %c0_i32_0 : i32, i32, i32
  }
  func.func @transform_8(%arg0: i32) -> (i32, i32, i32) {
    %c0_i32 = arith.constant 0 : i32
    %c0_i32_0 = arith.constant 0 : i32
    %c0_i32_1 = arith.constant 0 : i32
    return %arg0, %c0_i32, %c0_i32_0 : i32, i32, i32
  }
  func.func @transform_9(%arg0: i32) -> (i32, i32, i32) {
    %c0_i32 = arith.constant 0 : i32
    %c0_i32_0 = arith.constant 0 : i32
    %c0_i32_1 = arith.constant 0 : i32
    return %arg0, %c0_i32, %c0_i32_0 : i32, i32, i32
  }
  func.func @transform_10(%arg0: i32) -> (i32, i32, i32) {
    %c0_i32 = arith.constant 0 : i32
    %c0_i32_0 = arith.constant 0 : i32
    %c0_i32_1 = arith.constant 0 : i32
    return %arg0, %c0_i32, %c0_i32_0 : i32, i32, i32
  }
  func.func @transform_11(%arg0: i32) -> (i32, i32, i32) {
    %c0_i32 = arith.constant 0 : i32
    %c0_i32_0 = arith.constant 0 : i32
    %c0_i32_1 = arith.constant 0 : i32
    return %arg0, %c0_i32, %c0_i32_0 : i32, i32, i32
  }
  func.func @transform_12(%arg0: i32) -> (i32, i32, i32) {
    %c0_i32 = arith.constant 0 : i32
    %c0_i32_0 = arith.constant 0 : i32
    %c0_i32_1 = arith.constant 0 : i32
    return %arg0, %c0_i32, %c0_i32_0 : i32, i32, i32
  }
  func.func @transform_13(%arg0: i32) -> (i32, i32, i32) {
    %c0_i32 = arith.constant 0 : i32
    %c0_i32_0 = arith.constant 0 : i32
    %c0_i32_1 = arith.constant 0 : i32
    return %arg0, %c0_i32, %c0_i32_0 : i32, i32, i32
  }
  func.func @transform_14(%arg0: i32) -> (i32, i32, i32) {
    %c0_i32 = arith.constant 0 : i32
    %c0_i32_0 = arith.constant 0 : i32
    %c0_i32_1 = arith.constant 0 : i32
    return %arg0, %c0_i32, %c0_i32_0 : i32, i32, i32
  }
  func.func @transform_15(%arg0: i32) -> (i32, i32, i32) {
    %c0_i32 = arith.constant 0 : i32
    %c0_i32_0 = arith.constant 0 : i32
    %c0_i32_1 = arith.constant 0 : i32
    return %arg0, %c0_i32, %c0_i32_0 : i32, i32, i32
  }
  func.func @transform_16(%arg0: i32) -> (i32, i32) {
    %c0_i32 = arith.constant 0 : i32
    %c0_i32_0 = arith.constant 0 : i32
    %c0_i32_1 = arith.constant 0 : i32
    return %c0_i32, %c0_i32_0 : i32, i32
  }
  func.func @transform_17(%arg0: i32) -> (i32, i32) {
    %c0_i32 = arith.constant 0 : i32
    %c0_i32_0 = arith.constant 0 : i32
    %c0_i32_1 = arith.constant 0 : i32
    return %c0_i32, %c0_i32_0 : i32, i32
  }
  func.func @transform_18(%arg0: i32) -> (i32, i32) {
    %c0_i32 = arith.constant 0 : i32
    %c0_i32_0 = arith.constant 0 : i32
    %c0_i32_1 = arith.constant 0 : i32
    return %c0_i32, %c0_i32_0 : i32, i32
  }
  func.func @transform_19(%arg0: i32) -> (i32, i32) {
    %c0_i32 = arith.constant 0 : i32
    %c0_i32_0 = arith.constant 0 : i32
    %c0_i32_1 = arith.constant 0 : i32
    return %c0_i32, %c0_i32_0 : i32, i32
  }
}

</mosaic_0001>

<llo_original>
// kernel: tpu_custom_call.1
$region0: #{tpu_custom_call.1}
  #allocation0 [shape = 'u32[]', space=smem, size = 0x4, offset = 0x4, fixed_abs, tag = 'smem constant byte address 0x4 - core index']
  #allocation1 [shape = 'u32[72,128]{1,0:T(1,128)}', space=vmem, size = 0x9000, scoped, tag = 'internal scratch']
  #allocation2 [shape = 'f32[2,8,32]{2,1,0:T(8,128)}', space=vmem, size = 0x2000, scoped, tag = 'scratch operand']
  %s0 = inlined_call_operand.vmem [shape: f32[2,8,32], index: 0, kind: input, shape index: {}]
  %s1 = inlined_call_operand.vmem [shape: f32[8,32], index: 1, kind: input, shape index: {}]
  %s2 = inlined_call_operand.vmem [shape: f32[8,8], index: 2, kind: input, shape index: {}]
  %s3 = inlined_call_operand.vmem [shape: f32[2,8], index: 3, kind: input, shape index: {}]
  %s4 = inlined_call_operand.vmem [shape: f32[2,1,32], index: 4, kind: input, shape index: {}]
  %s5 = inlined_call_operand.vmem [shape: f32[2,1,32], index: 5, kind: input, shape index: {}]
  %s6 = inlined_call_operand.vmem [shape: bf16[2,32,96], index: 6, kind: input, shape index: {}]
  %s7 = inlined_call_operand.vmem [shape: f32[2,1,96], index: 7, kind: input, shape index: {}]
  %s8 = inlined_call_operand.vmem [shape: bf16[2,32,32], index: 8, kind: input, shape index: {}]
  %s9 = inlined_call_operand.vmem [shape: f32[2,1,32], index: 9, kind: input, shape index: {}]
  %s10 = inlined_call_operand.vmem [shape: f32[2,1,32], index: 10, kind: input, shape index: {}]
  %s11 = inlined_call_operand.vmem [shape: f32[2,1,32], index: 11, kind: input, shape index: {}]
  %s12 = inlined_call_operand.vmem [shape: bf16[2,32,128], index: 12, kind: input, shape index: {}]
  %s13 = inlined_call_operand.vmem [shape: f32[2,1,128], index: 13, kind: input, shape index: {}]
  %s14 = inlined_call_operand.vmem [shape: bf16[2,128,32], index: 14, kind: input, shape index: {}]
  %s15 = inlined_call_operand.vmem [shape: f32[2,1,32], index: 15, kind: input, shape index: {}]
  %s16 = inlined_call_operand.vmem [shape: f32[1,32], index: 16, kind: input, shape index: {}]
  %s17 = inlined_call_operand.vmem [shape: f32[1,32], index: 17, kind: input, shape index: {}]
  %s18 = inlined_call_operand.vmem [shape: bf16[32,16], index: 18, kind: input, shape index: {}]
  %s19 = inlined_call_operand.hbm [shape: f32[2,16], index: 19, kind: output, shape index: {}]
  %s20 = sld [smem:[#allocation0]]
  $region117: #{tpu_custom_call.1} parent=0
    _
  %s22 = ssub.s32 1, %s20
  %s23 = scalar_select 0, %s22, %s20
  $region1: #{tpu_custom_call.1} parent=0
    #allocation3 [shape = 'u8[1024]{0}', space=vmem, size = 0x400, scoped, tag = 'output window, operand 0, single buffered']
    #allocation4 [shape = 's32[2]{0}', space=sflag, size = 0x8, scoped, tag = 'scoped memory for tpu_custom_call.1']
    %24 = vsyncpa [#allocation4], 0
    loop: start=0, step=1, limit=4
    $region2: #{tpu_custom_call.1} parent=1 // loop_pre_header
      _
    $region3: #{tpu_custom_call.1} parent=1 // loop_header
      %s26 = sphi 0, %s30
      %p27 = scmp.ge.s32.totalorder %s26, 4
      %s34 = sphi 0, %s34
      %s36 = sphi 0, %s34
      %s37 = sphi 0, %s36
      %s51 = sphi 0, %s37
      %s55 = sphi 0, %s55
      %s57 = sphi 0, %s55
      %s58 = sphi 0, %s57
      %s72 = sphi 0, %s58
      %s76 = sphi 0, %s76
      %s78 = sphi 0, %s76
      %s79 = sphi 0, %s78
      %s93 = sphi 0, %s79
      %s97 = sphi 0, %s97
      %s99 = sphi 0, %s97
      %s100 = sphi 0, %s99
      %s114 = sphi 0, %s100
      %s120 = sphi 0, %s122
      %s123 = sphi 0, %s120
      %s124 = sphi 0, %s123
      %s140 = sphi 0, %s124
      %s146 = sphi 0, %s148
      %s149 = sphi 0, %s146
      %s150 = sphi 0, %s149
      %s166 = sphi 0, %s150
      %s172 = sphi 0, %s174
      %s175 = sphi 0, %s172
      %s176 = sphi 0, %s175
      %s192 = sphi 0, %s176
      %s198 = sphi 0, %s200
      %s201 = sphi 0, %s198
      %s202 = sphi 0, %s201
      %s218 = sphi 0, %s202
      %s224 = sphi 0, %s226
      %s227 = sphi 0, %s224
      %s228 = sphi 0, %s227
      %s244 = sphi 0, %s228
      %s250 = sphi 0, %s252
      %s253 = sphi 0, %s250
      %s254 = sphi 0, %s253
      %s270 = sphi 0, %s254
      %s276 = sphi 0, %s278
      %s279 = sphi 0, %s276
      %s280 = sphi 0, %s279
      %s296 = sphi 0, %s280
      %s302 = sphi 0, %s304
      %s305 = sphi 0, %s302
      %s306 = sphi 0, %s305
      %s322 = sphi 0, %s306
      %s328 = sphi 0, %s330
      %s331 = sphi 0, %s328
      %s332 = sphi 0, %s331
      %s348 = sphi 0, %s332
      %s354 = sphi 0, %s356
      %s357 = sphi 0, %s354
      %s358 = sphi 0, %s357
      %s374 = sphi 0, %s358
      %s380 = sphi 0, %s382
      %s383 = sphi 0, %s380
      %s384 = sphi 0, %s383
      %s400 = sphi 0, %s384
      %s406 = sphi 0, %s408
      %s409 = sphi 0, %s406
      %s410 = sphi 0, %s409
      %s426 = sphi 0, %s410
      %s430 = sphi 0, %s430
      %s432 = sphi 0, %s430
      %s433 = sphi 0, %s432
      %s447 = sphi 0, %s433
      %s451 = sphi 0, %s451
      %s453 = sphi 0, %s451
      %s454 = sphi 0, %s453
      %s468 = sphi 0, %s454
      %s472 = sphi 0, %s472
      %s474 = sphi 0, %s472
      %s475 = sphi 0, %s474
      %s489 = sphi 0, %s475
      %s493 = sphi 0, %s493
      %s495 = sphi 0, %s493
      %s496 = sphi 0, %s495
      %s510 = sphi 0, %s496
    $region4: #{tpu_custom_call.1} parent=1 // loop_header_branch
      %29 = sbr.rel (%p27) target = $region8
    $region5: #{tpu_custom_call.1} parent=1 // loop_body
      %s31 = ssub.s32 %s26, 1
      %s32 = ssub.s32 %s26, 2
      %s33 = sadd.s32 %s26, 1
      %s35 = sadd.s32 %s34, 1
      %p38 = scmp.eq.s32.totalorder %s26, 1
      %p39 = scmp.ne.s32.totalorder %s34, %s36
      %p40 = scmp.eq.s32.totalorder %s26, 0
      %p41 = por %p39, %p40
      %p42 = scmp.ne.s32.totalorder %s34, %s36
      %p43 = scmp.eq.s32.totalorder %s31, 1
      %p44 = por %p42, %p43
      %p45 = scmp.ne.s32.totalorder %s36, %s37
      %p46 = scmp.eq.s32.totalorder %s31, 0
      %p47 = por %p45, %p46
      %p48 = scmp.ne.s32.totalorder %s36, %s37
      %p49 = scmp.eq.s32.totalorder %s32, 1
      %p50 = por %p48, %p49
      %p52 = scmp.ne.s32.totalorder %s37, %s51
      %p53 = scmp.eq.s32.totalorder %s32, 0
      %p54 = por %p52, %p53
      %s56 = sadd.s32 %s55, 1
      %p59 = scmp.eq.s32.totalorder %s26, 1
      %p60 = scmp.ne.s32.totalorder %s55, %s57
      %p61 = scmp.eq.s32.totalorder %s26, 0
      %p62 = por %p60, %p61
      %p63 = scmp.ne.s32.totalorder %s55, %s57
      %p64 = scmp.eq.s32.totalorder %s31, 1
      %p65 = por %p63, %p64
      %p66 = scmp.ne.s32.totalorder %s57, %s58
      %p67 = scmp.eq.s32.totalorder %s31, 0
      %p68 = por %p66, %p67
      %p69 = scmp.ne.s32.totalorder %s57, %s58
      %p70 = scmp.eq.s32.totalorder %s32, 1
      %p71 = por %p69, %p70
      %p73 = scmp.ne.s32.totalorder %s58, %s72
      %p74 = scmp.eq.s32.totalorder %s32, 0
      %p75 = por %p73, %p74
      %s77 = sadd.s32 %s76, 1
      %p80 = scmp.eq.s32.totalorder %s26, 1
      %p81 = scmp.ne.s32.totalorder %s76, %s78
      %p82 = scmp.eq.s32.totalorder %s26, 0
      %p83 = por %p81, %p82
      %p84 = scmp.ne.s32.totalorder %s76, %s78
      %p85 = scmp.eq.s32.totalorder %s31, 1
      %p86 = por %p84, %p85
      %p87 = scmp.ne.s32.totalorder %s78, %s79
      %p88 = scmp.eq.s32.totalorder %s31, 0
      %p89 = por %p87, %p88
      %p90 = scmp.ne.s32.totalorder %s78, %s79
      %p91 = scmp.eq.s32.totalorder %s32, 1
      %p92 = por %p90, %p91
      %p94 = scmp.ne.s32.totalorder %s79, %s93
      %p95 = scmp.eq.s32.totalorder %s32, 0
      %p96 = por %p94, %p95
      %s98 = sadd.s32 %s97, 1
      %p101 = scmp.eq.s32.totalorder %s26, 1
      %p102 = scmp.ne.s32.totalorder %s97, %s99
      %p103 = scmp.eq.s32.totalorder %s26, 0
      %p104 = por %p102, %p103
      %p105 = scmp.ne.s32.totalorder %s97, %s99
      %p106 = scmp.eq.s32.totalorder %s31, 1
      %p107 = por %p105, %p106
      %p108 = scmp.ne.s32.totalorder %s99, %s100
      %p109 = scmp.eq.s32.totalorder %s31, 0
      %p110 = por %p108, %p109
      %p111 = scmp.ne.s32.totalorder %s99, %s100
      %p112 = scmp.eq.s32.totalorder %s32, 1
      %p113 = por %p111, %p112
      %p115 = scmp.ne.s32.totalorder %s100, %s114
      %p116 = scmp.eq.s32.totalorder %s32, 0
      %p117 = por %p115, %p116
      %s118 = ssub.s32 %s26, %s33
      %p119 = scmp.eq.s32.totalorder %s118, 0
      %s121 = sadd.s32 %s120, 1
      %s122 = scalar_select %p119, %s120, %s121
      %p125 = pneg %p119
      %p126 = scmp.eq.s32.totalorder %s26, 1
      %p127 = por %p125, %p126
      %p128 = scmp.ne.s32.totalorder %s120, %s123
      %p129 = scmp.eq.s32.totalorder %s26, 0
      %p130 = por %p128, %p129
      %p131 = scmp.ne.s32.totalorder %s120, %s123
      %p132 = scmp.eq.s32.totalorder %s31, 1
      %p133 = por %p131, %p132
      %p134 = scmp.ne.s32.totalorder %s123, %s124
      %p135 = scmp.eq.s32.totalorder %s31, 0
      %p136 = por %p134, %p135
      %p137 = scmp.ne.s32.totalorder %s123, %s124
      %p138 = scmp.eq.s32.totalorder %s32, 1
      %p139 = por %p137, %p138
      %p141 = scmp.ne.s32.totalorder %s124, %s140
      %p142 = scmp.eq.s32.totalorder %s32, 0
      %p143 = por %p141, %p142
      %s144 = ssub.s32 %s26, %s33
      %p145 = scmp.eq.s32.totalorder %s144, 0
      %s147 = sadd.s32 %s146, 1
      %s148 = scalar_select %p145, %s146, %s147
      %p151 = pneg %p145
      %p152 = scmp.eq.s32.totalorder %s26, 1
      %p153 = por %p151, %p152
      %p154 = scmp.ne.s32.totalorder %s146, %s149
      %p155 = scmp.eq.s32.totalorder %s26, 0
      %p156 = por %p154, %p155
      %p157 = scmp.ne.s32.totalorder %s146, %s149
      %p158 = scmp.eq.s32.totalorder %s31, 1
      %p159 = por %p157, %p158
      %p160 = scmp.ne.s32.totalorder %s149, %s150
      %p161 = scmp.eq.s32.totalorder %s31, 0
      %p162 = por %p160, %p161
      %p163 = scmp.ne.s32.totalorder %s149, %s150
      %p164 = scmp.eq.s32.totalorder %s32, 1
      %p165 = por %p163, %p164
      %p167 = scmp.ne.s32.totalorder %s150, %s166
      %p168 = scmp.eq.s32.totalorder %s32, 0
      %p169 = por %p167, %p168
      %s170 = ssub.s32 %s26, %s33
      %p171 = scmp.eq.s32.totalorder %s170, 0
      %s173 = sadd.s32 %s172, 1
      %s174 = scalar_select %p171, %s172, %s173
      %p177 = pneg %p171
      %p178 = scmp.eq.s32.totalorder %s26, 1
      %p179 = por %p177, %p178
      %p180 = scmp.ne.s32.totalorder %s172, %s175
      %p181 = scmp.eq.s32.totalorder %s26, 0
      %p182 = por %p180, %p181
      %p183 = scmp.ne.s32.totalorder %s172, %s175
      %p184 = scmp.eq.s32.totalorder %s31, 1
      %p185 = por %p183, %p184
      %p186 = scmp.ne.s32.totalorder %s175, %s176
      %p187 = scmp.eq.s32.totalorder %s31, 0
      %p188 = por %p186, %p187
      %p189 = scmp.ne.s32.totalorder %s175, %s176
      %p190 = scmp.eq.s32.totalorder %s32, 1
      %p191 = por %p189, %p190
      %p193 = scmp.ne.s32.totalorder %s176, %s192
      %p194 = scmp.eq.s32.totalorder %s32, 0
      %p195 = por %p193, %p194
      %s196 = ssub.s32 %s26, %s33
      %p197 = scmp.eq.s32.totalorder %s196, 0
      %s199 = sadd.s32 %s198, 1
      %s200 = scalar_select %p197, %s198, %s199
      %p203 = pneg %p197
      %p204 = scmp.eq.s32.totalorder %s26, 1
      %p205 = por %p203, %p204
      %p206 = scmp.ne.s32.totalorder %s198, %s201
      %p207 = scmp.eq.s32.totalorder %s26, 0
      %p208 = por %p206, %p207
      %p209 = scmp.ne.s32.totalorder %s198, %s201
      %p210 = scmp.eq.s32.totalorder %s31, 1
      %p211 = por %p209, %p210
      %p212 = scmp.ne.s32.totalorder %s201, %s202
      %p213 = scmp.eq.s32.totalorder %s31, 0
      %p214 = por %p212, %p213
      %p215 = scmp.ne.s32.totalorder %s201, %s202
      %p216 = scmp.eq.s32.totalorder %s32, 1
      %p217 = por %p215, %p216
      %p219 = scmp.ne.s32.totalorder %s202, %s218
      %p220 = scmp.eq.s32.totalorder %s32, 0
      %p221 = por %p219, %p220
      %s222 = ssub.s32 %s26, %s33
      %p223 = scmp.eq.s32.totalorder %s222, 0
      %s225 = sadd.s32 %s224, 1
      %s226 = scalar_select %p223, %s224, %s225
      %p229 = pneg %p223
      %p230 = scmp.eq.s32.totalorder %s26, 1
      %p231 = por %p229, %p230
      %p232 = scmp.ne.s32.totalorder %s224, %s227
      %p233 = scmp.eq.s32.totalorder %s26, 0
      %p234 = por %p232, %p233
      %p235 = scmp.ne.s32.totalorder %s224, %s227
      %p236 = scmp.eq.s32.totalorder %s31, 1
      %p237 = por %p235, %p236
      %p238 = scmp.ne.s32.totalorder %s227, %s228
      %p239 = scmp.eq.s32.totalorder %s31, 0
      %p240 = por %p238, %p239
      %p241 = scmp.ne.s32.totalorder %s227, %s228
      %p242 = scmp.eq.s32.totalorder %s32, 1
      %p243 = por %p241, %p242
      %p245 = scmp.ne.s32.totalorder %s228, %s244
      %p246 = scmp.eq.s32.totalorder %s32, 0
      %p247 = por %p245, %p246
      %s248 = ssub.s32 %s26, %s33
      %p249 = scmp.eq.s32.totalorder %s248, 0
      %s251 = sadd.s32 %s250, 1
      %s252 = scalar_select %p249, %s250, %s251
      %p255 = pneg %p249
      %p256 = scmp.eq.s32.totalorder %s26, 1
      %p257 = por %p255, %p256
      %p258 = scmp.ne.s32.totalorder %s250, %s253
      %p259 = scmp.eq.s32.totalorder %s26, 0
      %p260 = por %p258, %p259
      %p261 = scmp.ne.s32.totalorder %s250, %s253
      %p262 = scmp.eq.s32.totalorder %s31, 1
      %p263 = por %p261, %p262
      %p264 = scmp.ne.s32.totalorder %s253, %s254
      %p265 = scmp.eq.s32.totalorder %s31, 0
      %p266 = por %p264, %p265
      %p267 = scmp.ne.s32.totalorder %s253, %s254
      %p268 = scmp.eq.s32.totalorder %s32, 1
      %p269 = por %p267, %p268
      %p271 = scmp.ne.s32.totalorder %s254, %s270
      %p272 = scmp.eq.s32.totalorder %s32, 0
      %p273 = por %p271, %p272
      %s274 = ssub.s32 %s26, %s33
      %p275 = scmp.eq.s32.totalorder %s274, 0
      %s277 = sadd.s32 %s276, 1
      %s278 = scalar_select %p275, %s276, %s277
      %p281 = pneg %p275
      %p282 = scmp.eq.s32.totalorder %s26, 1
      %p283 = por %p281, %p282
      %p284 = scmp.ne.s32.totalorder %s276, %s279
      %p285 = scmp.eq.s32.totalorder %s26, 0
      %p286 = por %p284, %p285
      %p287 = scmp.ne.s32.totalorder %s276, %s279
      %p288 = scmp.eq.s32.totalorder %s31, 1
      %p289 = por %p287, %p288
      %p290 = scmp.ne.s32.totalorder %s279, %s280
      %p291 = scmp.eq.s32.totalorder %s31, 0
      %p292 = por %p290, %p291
      %p293 = scmp.ne.s32.totalorder %s279, %s280
      %p294 = scmp.eq.s32.totalorder %s32, 1
      %p295 = por %p293, %p294
      %p297 = scmp.ne.s32.totalorder %s280, %s296
      %p298 = scmp.eq.s32.totalorder %s32, 0
      %p299 = por %p297, %p298
      %s300 = ssub.s32 %s26, %s33
      %p301 = scmp.eq.s32.totalorder %s300, 0
      %s303 = sadd.s32 %s302, 1
      %s304 = scalar_select %p301, %s302, %s303
      %p307 = pneg %p301
      %p308 = scmp.eq.s32.totalorder %s26, 1
      %p309 = por %p307, %p308
      %p310 = scmp.ne.s32.totalorder %s302, %s305
      %p311 = scmp.eq.s32.totalorder %s26, 0
      %p312 = por %p310, %p311
      %p313 = scmp.ne.s32.totalorder %s302, %s305
      %p314 = scmp.eq.s32.totalorder %s31, 1
      %p315 = por %p313, %p314
      %p316 = scmp.ne.s32.totalorder %s305, %s306
      %p317 = scmp.eq.s32.totalorder %s31, 0
      %p318 = por %p316, %p317
      %p319 = scmp.ne.s32.totalorder %s305, %s306
      %p320 = scmp.eq.s32.totalorder %s32, 1
      %p321 = por %p319, %p320
      %p323 = scmp.ne.s32.totalorder %s306, %s322
      %p324 = scmp.eq.s32.totalorder %s32, 0
      %p325 = por %p323, %p324
      %s326 = ssub.s32 %s26, %s33
      %p327 = scmp.eq.s32.totalorder %s326, 0
      %s329 = sadd.s32 %s328, 1
      %s330 = scalar_select %p327, %s328, %s329
      %p333 = pneg %p327
      %p334 = scmp.eq.s32.totalorder %s26, 1
      %p335 = por %p333, %p334
      %p336 = scmp.ne.s32.totalorder %s328, %s331
      %p337 = scmp.eq.s32.totalorder %s26, 0
      %p338 = por %p336, %p337
      %p339 = scmp.ne.s32.totalorder %s328, %s331
      %p340 = scmp.eq.s32.totalorder %s31, 1
      %p341 = por %p339, %p340
      %p342 = scmp.ne.s32.totalorder %s331, %s332
      %p343 = scmp.eq.s32.totalorder %s31, 0
      %p344 = por %p342, %p343
      %p345 = scmp.ne.s32.totalorder %s331, %s332
      %p346 = scmp.eq.s32.totalorder %s32, 1
      %p347 = por %p345, %p346
      %p349 = scmp.ne.s32.totalorder %s332, %s348
      %p350 = scmp.eq.s32.totalorder %s32, 0
      %p351 = por %p349, %p350
      %s352 = ssub.s32 %s26, %s33
      %p353 = scmp.eq.s32.totalorder %s352, 0
      %s355 = sadd.s32 %s354, 1
      %s356 = scalar_select %p353, %s354, %s355
      %p359 = pneg %p353
      %p360 = scmp.eq.s32.totalorder %s26, 1
      %p361 = por %p359, %p360
      %p362 = scmp.ne.s32.totalorder %s354, %s357
      %p363 = scmp.eq.s32.totalorder %s26, 0
      %p364 = por %p362, %p363
      %p365 = scmp.ne.s32.totalorder %s354, %s357
      %p366 = scmp.eq.s32.totalorder %s31, 1
      %p367 = por %p365, %p366
      %p368 = scmp.ne.s32.totalorder %s357, %s358
      %p369 = scmp.eq.s32.totalorder %s31, 0
      %p370 = por %p368, %p369
      %p371 = scmp.ne.s32.totalorder %s357, %s358
      %p372 = scmp.eq.s32.totalorder %s32, 1
      %p373 = por %p371, %p372
      %p375 = scmp.ne.s32.totalorder %s358, %s374
      %p376 = scmp.eq.s32.totalorder %s32, 0
      %p377 = por %p375, %p376
      %s378 = ssub.s32 %s26, %s33
      %p379 = scmp.eq.s32.totalorder %s378, 0
      %s381 = sadd.s32 %s380, 1
      %s382 = scalar_select %p379, %s380, %s381
      %p385 = pneg %p379
      %p386 = scmp.eq.s32.totalorder %s26, 1
      %p387 = por %p385, %p386
      %p388 = scmp.ne.s32.totalorder %s380, %s383
      %p389 = scmp.eq.s32.totalorder %s26, 0
      %p390 = por %p388, %p389
      %p391 = scmp.ne.s32.totalorder %s380, %s383
      %p392 = scmp.eq.s32.totalorder %s31, 1
      %p393 = por %p391, %p392
      %p394 = scmp.ne.s32.totalorder %s383, %s384
      %p395 = scmp.eq.s32.totalorder %s31, 0
      %p396 = por %p394, %p395
      %p397 = scmp.ne.s32.totalorder %s383, %s384
      %p398 = scmp.eq.s32.totalorder %s32, 1
      %p399 = por %p397, %p398
      %p401 = scmp.ne.s32.totalorder %s384, %s400
      %p402 = scmp.eq.s32.totalorder %s32, 0
      %p403 = por %p401, %p402
      %s404 = ssub.s32 %s26, %s33
      %p405 = scmp.eq.s32.totalorder %s404, 0
      %s407 = sadd.s32 %s406, 1
      %s408 = scalar_select %p405, %s406, %s407
      %p411 = pneg %p405
      %p412 = scmp.eq.s32.totalorder %s26, 1
      %p413 = por %p411, %p412
      %p414 = scmp.ne.s32.totalorder %s406, %s409
      %p415 = scmp.eq.s32.totalorder %s26, 0
      %p416 = por %p414, %p415
      %p417 = scmp.ne.s32.totalorder %s406, %s409
      %p418 = scmp.eq.s32.totalorder %s31, 1
      %p419 = por %p417, %p418
      %p420 = scmp.ne.s32.totalorder %s409, %s410
      %p421 = scmp.eq.s32.totalorder %s31, 0
      %p422 = por %p420, %p421
      %p423 = scmp.ne.s32.totalorder %s409, %s410
      %p424 = scmp.eq.s32.totalorder %s32, 1
      %p425 = por %p423, %p424
      %p427 = scmp.ne.s32.totalorder %s410, %s426
      %p428 = scmp.eq.s32.totalorder %s32, 0
      %p429 = por %p427, %p428
      %s431 = sadd.s32 %s430, 1
      %p434 = scmp.eq.s32.totalorder %s26, 1
      %p435 = scmp.ne.s32.totalorder %s430, %s432
      %p436 = scmp.eq.s32.totalorder %s26, 0
      %p437 = por %p435, %p436
      %p438 = scmp.ne.s32.totalorder %s430, %s432
      %p439 = scmp.eq.s32.totalorder %s31, 1
      %p440 = por %p438, %p439
      %p441 = scmp.ne.s32.totalorder %s432, %s433
      %p442 = scmp.eq.s32.totalorder %s31, 0
      %p443 = por %p441, %p442
      %p444 = scmp.ne.s32.totalorder %s432, %s433
      %p445 = scmp.eq.s32.totalorder %s32, 1
      %p446 = por %p444, %p445
      %p448 = scmp.ne.s32.totalorder %s433, %s447
      %p449 = scmp.eq.s32.totalorder %s32, 0
      %p450 = por %p448, %p449
      %s452 = sadd.s32 %s451, 1
      %p455 = scmp.eq.s32.totalorder %s26, 1
      %p456 = scmp.ne.s32.totalorder %s451, %s453
      %p457 = scmp.eq.s32.totalorder %s26, 0
      %p458 = por %p456, %p457
      %p459 = scmp.ne.s32.totalorder %s451, %s453
      %p460 = scmp.eq.s32.totalorder %s31, 1
      %p461 = por %p459, %p460
      %p462 = scmp.ne.s32.totalorder %s453, %s454
      %p463 = scmp.eq.s32.totalorder %s31, 0
      %p464 = por %p462, %p463
      %p465 = scmp.ne.s32.totalorder %s453, %s454
      %p466 = scmp.eq.s32.totalorder %s32, 1
      %p467 = por %p465, %p466
      %p469 = scmp.ne.s32.totalorder %s454, %s468
      %p470 = scmp.eq.s32.totalorder %s32, 0
      %p471 = por %p469, %p470
      %s473 = sadd.s32 %s472, 1
      %p476 = scmp.eq.s32.totalorder %s26, 1
      %p477 = scmp.ne.s32.totalorder %s472, %s474
      %p478 = scmp.eq.s32.totalorder %s26, 0
      %p479 = por %p477, %p478
      %p480 = scmp.ne.s32.totalorder %s472, %s474
      %p481 = scmp.eq.s32.totalorder %s31, 1
      %p482 = por %p480, %p481
      %p483 = scmp.ne.s32.totalorder %s474, %s475
      %p484 = scmp.eq.s32.totalorder %s31, 0
      %p485 = por %p483, %p484
      %p486 = scmp.ne.s32.totalorder %s474, %s475
      %p487 = scmp.eq.s32.totalorder %s32, 1
      %p488 = por %p486, %p487
      %p490 = scmp.ne.s32.totalorder %s475, %s489
      %p491 = scmp.eq.s32.totalorder %s32, 0
      %p492 = por %p490, %p491
      %s494 = sadd.s32 %s493, 1
      %p497 = scmp.eq.s32.totalorder %s26, 1
      %p498 = scmp.ne.s32.totalorder %s493, %s495
      %p499 = scmp.eq.s32.totalorder %s26, 0
      %p500 = por %p498, %p499
      %p501 = scmp.ne.s32.totalorder %s493, %s495
      %p502 = scmp.eq.s32.totalorder %s31, 1
      %p503 = por %p501, %p502
      %p504 = scmp.ne.s32.totalorder %s495, %s496
      %p505 = scmp.eq.s32.totalorder %s31, 0
      %p506 = por %p504, %p505
      %p507 = scmp.ne.s32.totalorder %s495, %s496
      %p508 = scmp.eq.s32.totalorder %s32, 1
      %p509 = por %p507, %p508
      %p511 = scmp.ne.s32.totalorder %s496, %s510
      %p512 = scmp.eq.s32.totalorder %s32, 0
      %p513 = por %p511, %p512
      %p514 = scmp.le.s32.totalorder 1, %s26
      %p515 = scmp.lt.s32.totalorder %s26, 3
      %p516 = pnand %p514, %p515
      %p517 = pneg %p516
      // Predicated region
      $region9: #{tpu_custom_call.1} parent=5 // pred_check
        _
      $region10: #{tpu_custom_call.1} parent=5 // pred_check_branch
        %519 = sbr.rel (%p516) target = $region12
      $region11: #{tpu_custom_call.1} parent=5 // pred_region
        %s520 = ssub.s32 %s26, 1
        // Predicated region
        $region13: #{tpu_custom_call.1} parent=11 // pred_check
          %p521 = pneg %p47
        $region14: #{tpu_custom_call.1} parent=11 // pred_check_branch
          %523 = sbr.rel (%p521) target = $region16
        $region15: #{tpu_custom_call.1} parent=11 // pred_region
          _
        $region16: #{tpu_custom_call.1} parent=11 // pred_fallthru
          _
        // Predicated region
        $region17: #{tpu_custom_call.1} parent=11 // pred_check
          %p524 = pneg %p68
        $region18: #{tpu_custom_call.1} parent=11 // pred_check_branch
          %526 = sbr.rel (%p524) target = $region20
        $region19: #{tpu_custom_call.1} parent=11 // pred_region
          _
        $region20: #{tpu_custom_call.1} parent=11 // pred_fallthru
          _
        // Predicated region
        $region21: #{tpu_custom_call.1} parent=11 // pred_check
          %p527 = pneg %p89
        $region22: #{tpu_custom_call.1} parent=11 // pred_check_branch
          %529 = sbr.rel (%p527) target = $region24
        $region23: #{tpu_custom_call.1} parent=11 // pred_region
          _
        $region24: #{tpu_custom_call.1} parent=11 // pred_fallthru
          _
        // Predicated region
        $region25: #{tpu_custom_call.1} parent=11 // pred_check
          %p530 = pneg %p110
        $region26: #{tpu_custom_call.1} parent=11 // pred_check_branch
          %532 = sbr.rel (%p530) target = $region28
        $region27: #{tpu_custom_call.1} parent=11 // pred_region
          _
        $region28: #{tpu_custom_call.1} parent=11 // pred_fallthru
          _
        // Predicated region
        $region29: #{tpu_custom_call.1} parent=11 // pred_check
          %p533 = pneg %p443
        $region30: #{tpu_custom_call.1} parent=11 // pred_check_branch
          %535 = sbr.rel (%p533) target = $region32
        $region31: #{tpu_custom_call.1} parent=11 // pred_region
          _
        $region32: #{tpu_custom_call.1} parent=11 // pred_fallthru
          _
        // Predicated region
        $region33: #{tpu_custom_call.1} parent=11 // pred_check
          %p536 = pneg %p464
        $region34: #{tpu_custom_call.1} parent=11 // pred_check_branch
          %538 = sbr.rel (%p536) target = $region36
        $region35: #{tpu_custom_call.1} parent=11 // pred_region
          _
        $region36: #{tpu_custom_call.1} parent=11 // pred_fallthru
          _
        // Predicated region
        $region37: #{tpu_custom_call.1} parent=11 // pred_check
          %p539 = pneg %p485
        $region38: #{tpu_custom_call.1} parent=11 // pred_check_branch
          %541 = sbr.rel (%p539) target = $region40
        $region39: #{tpu_custom_call.1} parent=11 // pred_region
          _
        $region40: #{tpu_custom_call.1} parent=11 // pred_fallthru
          _
      $region12: #{tpu_custom_call.1} parent=5 // pred_fallthru
        _
      %p542 = scmp.lt.s32.totalorder %s26, 2
      // Predicated region
      $region41: #{tpu_custom_call.1} parent=5 // pred_check
        %p543 = pneg %p542
      $region42: #{tpu_custom_call.1} parent=5 // pred_check_branch
        %545 = sbr.rel (%p543) target = $region44
      $region43: #{tpu_custom_call.1} parent=5 // pred_region
        // Predicated region
        $region45: #{tpu_custom_call.1} parent=43 // pred_check
          %p546 = pneg %p130
        $region46: #{tpu_custom_call.1} parent=43 // pred_check_branch
          %548 = sbr.rel (%p546) target = $region48
        $region47: #{tpu_custom_call.1} parent=43 // pred_region
          %p549 = scmp.lt.s32.totalorder %s26, 1
          %s550 = scalar_select %p549, %s26, 1
          %s551 = scalar_lea.vmem %s4, %s550
        $region48: #{tpu_custom_call.1} parent=43 // pred_fallthru
          _
        // Predicated region
        $region49: #{tpu_custom_call.1} parent=43 // pred_check
          %p552 = pneg %p156
        $region50: #{tpu_custom_call.1} parent=43 // pred_check_branch
          %554 = sbr.rel (%p552) target = $region52
        $region51: #{tpu_custom_call.1} parent=43 // pred_region
          %p555 = scmp.lt.s32.totalorder %s26, 1
          %s556 = scalar_select %p555, %s26, 1
          %s557 = scalar_lea.vmem %s5, %s556
        $region52: #{tpu_custom_call.1} parent=43 // pred_fallthru
          _
        // Predicated region
        $region53: #{tpu_custom_call.1} parent=43 // pred_check
          %p558 = pneg %p182
        $region54: #{tpu_custom_call.1} parent=43 // pred_check_branch
          %560 = sbr.rel (%p558) target = $region56
        $region55: #{tpu_custom_call.1} parent=43 // pred_region
          %p561 = scmp.lt.s32.totalorder %s26, 1
          %s562 = scalar_select %p561, %s26, 1
          %s563 = smul.addr %s562, 4
          %s564 = smul.addr %s563, 4
          %s565 = scalar_lea.vmem %s6, %s564
        $region56: #{tpu_custom_call.1} parent=43 // pred_fallthru
          _
        // Predicated region
        $region57: #{tpu_custom_call.1} parent=43 // pred_check
          %p566 = pneg %p208
        $region58: #{tpu_custom_call.1} parent=43 // pred_check_branch
          %568 = sbr.rel (%p566) target = $region60
        $region59: #{tpu_custom_call.1} parent=43 // pred_region
          %p569 = scmp.lt.s32.totalorder %s26, 1
          %s570 = scalar_select %p569, %s26, 1
          %s571 = scalar_lea.vmem %s7, %s570
        $region60: #{tpu_custom_call.1} parent=43 // pred_fallthru
          _
        // Predicated region
        $region61: #{tpu_custom_call.1} parent=43 // pred_check
          %p572 = pneg %p234
        $region62: #{tpu_custom_call.1} parent=43 // pred_check_branch
          %574 = sbr.rel (%p572) target = $region64
        $region63: #{tpu_custom_call.1} parent=43 // pred_region
          %p575 = scmp.lt.s32.totalorder %s26, 1
          %s576 = scalar_select %p575, %s26, 1
          %s577 = smul.addr %s576, 4
          %s578 = smul.addr %s577, 4
          %s579 = scalar_lea.vmem %s8, %s578
        $region64: #{tpu_custom_call.1} parent=43 // pred_fallthru
          _
        // Predicated region
        $region65: #{tpu_custom_call.1} parent=43 // pred_check
          %p580 = pneg %p260
        $region66: #{tpu_custom_call.1} parent=43 // pred_check_branch
          %582 = sbr.rel (%p580) target = $region68
        $region67: #{tpu_custom_call.1} parent=43 // pred_region
          %p583 = scmp.lt.s32.totalorder %s26, 1
          %s584 = scalar_select %p583, %s26, 1
          %s585 = scalar_lea.vmem %s9, %s584
        $region68: #{tpu_custom_call.1} parent=43 // pred_fallthru
          _
        // Predicated region
        $region69: #{tpu_custom_call.1} parent=43 // pred_check
          %p586 = pneg %p286
        $region70: #{tpu_custom_call.1} parent=43 // pred_check_branch
          %588 = sbr.rel (%p586) target = $region72
        $region71: #{tpu_custom_call.1} parent=43 // pred_region
          %p589 = scmp.lt.s32.totalorder %s26, 1
          %s590 = scalar_select %p589, %s26, 1
          %s591 = scalar_lea.vmem %s10, %s590
        $region72: #{tpu_custom_call.1} parent=43 // pred_fallthru
          _
        // Predicated region
        $region73: #{tpu_custom_call.1} parent=43 // pred_check
          %p592 = pneg %p312
        $region74: #{tpu_custom_call.1} parent=43 // pred_check_branch
          %594 = sbr.rel (%p592) target = $region76
        $region75: #{tpu_custom_call.1} parent=43 // pred_region
          %p595 = scmp.lt.s32.totalorder %s26, 1
          %s596 = scalar_select %p595, %s26, 1
          %s597 = scalar_lea.vmem %s11, %s596
        $region76: #{tpu_custom_call.1} parent=43 // pred_fallthru
          _
        // Predicated region
        $region77: #{tpu_custom_call.1} parent=43 // pred_check
          %p598 = pneg %p338
        $region78: #{tpu_custom_call.1} parent=43 // pred_check_branch
          %600 = sbr.rel (%p598) target = $region80
        $region79: #{tpu_custom_call.1} parent=43 // pred_region
          %p601 = scmp.lt.s32.totalorder %s26, 1
          %s602 = scalar_select %p601, %s26, 1
          %s603 = smul.addr %s602, 4
          %s604 = smul.addr %s603, 4
          %s605 = scalar_lea.vmem %s12, %s604
        $region80: #{tpu_custom_call.1} parent=43 // pred_fallthru
          _
        // Predicated region
        $region81: #{tpu_custom_call.1} parent=43 // pred_check
          %p606 = pneg %p364
        $region82: #{tpu_custom_call.1} parent=43 // pred_check_branch
          %608 = sbr.rel (%p606) target = $region84
        $region83: #{tpu_custom_call.1} parent=43 // pred_region
          %p609 = scmp.lt.s32.totalorder %s26, 1
          %s610 = scalar_select %p609, %s26, 1
          %s611 = scalar_lea.vmem %s13, %s610
        $region84: #{tpu_custom_call.1} parent=43 // pred_fallthru
          _
        // Predicated region
        $region85: #{tpu_custom_call.1} parent=43 // pred_check
          %p612 = pneg %p390
        $region86: #{tpu_custom_call.1} parent=43 // pred_check_branch
          %614 = sbr.rel (%p612) target = $region88
        $region87: #{tpu_custom_call.1} parent=43 // pred_region
          %p615 = scmp.lt.s32.totalorder %s26, 1
          %s616 = scalar_select %p615, %s26, 1
          %s617 = smul.addr %s616, 16
          %s618 = smul.addr %s617, 4
          %s619 = scalar_lea.vmem %s14, %s618
        $region88: #{tpu_custom_call.1} parent=43 // pred_fallthru
          _
        // Predicated region
        $region89: #{tpu_custom_call.1} parent=43 // pred_check
          %p620 = pneg %p416
        $region90: #{tpu_custom_call.1} parent=43 // pred_check_branch
          %622 = sbr.rel (%p620) target = $region92
        $region91: #{tpu_custom_call.1} parent=43 // pred_region
          %p623 = scmp.lt.s32.totalorder %s26, 1
          %s624 = scalar_select %p623, %s26, 1
          %s625 = scalar_lea.vmem %s15, %s624
        $region92: #{tpu_custom_call.1} parent=43 // pred_fallthru
          _
      $region44: #{tpu_custom_call.1} parent=5 // pred_fallthru
        _
      %p626 = scmp.le.s32.totalorder 1, %s26
      %p627 = scmp.lt.s32.totalorder %s26, 3
      %p628 = pnand %p626, %p627
      %p629 = pneg %p628
      // Predicated region
      $region93: #{tpu_custom_call.1} parent=5 // pred_check
        _
      $region94: #{tpu_custom_call.1} parent=5 // pred_check_branch
        %631 = sbr.rel (%p628) target = $region96
      $region95: #{tpu_custom_call.1} parent=5 // pred_region
        %s632 = ssub.s32 %s26, 1
        %p633 = pneg %p47
        %p634 = pneg %p44
        %p635 = pneg %p68
        %p636 = pneg %p65
        %p637 = pneg %p89
        %p638 = pneg %p86
        %p639 = pneg %p110
        %p640 = pneg %p107
        %p641 = scmp.lt.s32.totalorder %s31, 1
        %s642 = scalar_select %p641, %s31, 1
        %s643 = scalar_lea.vmem %s4, %s642
        %p644 = pneg %p136
        %p645 = pneg %p133
        %p646 = scmp.lt.s32.totalorder %s31, 1
        %s647 = scalar_select %p646, %s31, 1
        %s648 = scalar_lea.vmem %s5, %s647
        %p649 = pneg %p162
        %p650 = pneg %p159
        %p651 = scmp.lt.s32.totalorder %s31, 1
        %s652 = scalar_select %p651, %s31, 1
        %s653 = smul.addr %s652, 4
        %s654 = smul.addr %s653, 4
        %s655 = scalar_lea.vmem %s6, %s654
        %p656 = pneg %p188
        %p657 = pneg %p185
        %p658 = scmp.lt.s32.totalorder %s31, 1
        %s659 = scalar_select %p658, %s31, 1
        %s660 = scalar_lea.vmem %s7, %s659
        %p661 = pneg %p214
        %p662 = pneg %p211
        %p663 = scmp.lt.s32.totalorder %s31, 1
        %s664 = scalar_select %p663, %s31, 1
        %s665 = smul.addr %s664, 4
        %s666 = smul.addr %s665, 4
        %s667 = scalar_lea.vmem %s8, %s666
        %p668 = pneg %p240
        %p669 = pneg %p237
        %p670 = scmp.lt.s32.totalorder %s31, 1
        %s671 = scalar_select %p670, %s31, 1
        %s672 = scalar_lea.vmem %s9, %s671
        %p673 = pneg %p266
        %p674 = pneg %p263
        %p675 = scmp.lt.s32.totalorder %s31, 1
        %s676 = scalar_select %p675, %s31, 1
        %s677 = scalar_lea.vmem %s10, %s676
        %p678 = pneg %p292
        %p679 = pneg %p289
        %p680 = scmp.lt.s32.totalorder %s31, 1
        %s681 = scalar_select %p680, %s31, 1
        %s682 = scalar_lea.vmem %s11, %s681
        %p683 = pneg %p318
        %p684 = pneg %p315
        %p685 = scmp.lt.s32.totalorder %s31, 1
        %s686 = scalar_select %p685, %s31, 1
        %s687 = smul.addr %s686, 4
        %s688 = smul.addr %s687, 4
        %s689 = scalar_lea.vmem %s12, %s688
        %p690 = pneg %p344
        %p691 = pneg %p341
        %p692 = scmp.lt.s32.totalorder %s31, 1
        %s693 = scalar_select %p692, %s31, 1
        %s694 = scalar_lea.vmem %s13, %s693
        %p695 = pneg %p370
        %p696 = pneg %p367
        %p697 = scmp.lt.s32.totalorder %s31, 1
        %s698 = scalar_select %p697, %s31, 1
        %s699 = smul.addr %s698, 16
        %s700 = smul.addr %s699, 4
        %s701 = scalar_lea.vmem %s14, %s700
        %p702 = pneg %p396
        %p703 = pneg %p393
        %p704 = scmp.lt.s32.totalorder %s31, 1
        %s705 = scalar_select %p704, %s31, 1
        %s706 = scalar_lea.vmem %s15, %s705
        %p707 = pneg %p422
        %p708 = pneg %p419
        %p709 = pneg %p443
        %p710 = pneg %p440
        %p711 = pneg %p464
        %p712 = pneg %p461
        %p713 = pneg %p485
        %p714 = pneg %p482
        %p715 = pneg %p506
        %p716 = pneg %p503
        %p717 = scmp.lt.s32.totalorder %s31, 1
        %s718 = scalar_select %p717, %s31, 1
        %s719 = scalar_lea.vmem %s4, %s718
        %p720 = scmp.lt.s32.totalorder %s31, 1
        %s721 = scalar_select %p720, %s31, 1
        %s722 = scalar_lea.vmem %s5, %s721
        %p723 = scmp.lt.s32.totalorder %s31, 1
        %s724 = scalar_select %p723, %s31, 1
        %s725 = smul.addr %s724, 4
        %s726 = smul.addr %s725, 4
        %s727 = scalar_lea.vmem %s6, %s726
        %p728 = scmp.lt.s32.totalorder %s31, 1
        %s729 = scalar_select %p728, %s31, 1
        %s730 = scalar_lea.vmem %s7, %s729
        %p731 = scmp.lt.s32.totalorder %s31, 1
        %s732 = scalar_select %p731, %s31, 1
        %s733 = smul.addr %s732, 4
        %s734 = smul.addr %s733, 4
        %s735 = scalar_lea.vmem %s8, %s734
        %p736 = scmp.lt.s32.totalorder %s31, 1
        %s737 = scalar_select %p736, %s31, 1
        %s738 = scalar_lea.vmem %s9, %s737
        %p739 = scmp.lt.s32.totalorder %s31, 1
        %s740 = scalar_select %p739, %s31, 1
        %s741 = scalar_lea.vmem %s10, %s740
        %p742 = scmp.lt.s32.totalorder %s31, 1
        %s743 = scalar_select %p742, %s31, 1
        %s744 = scalar_lea.vmem %s11, %s743
        %p745 = scmp.lt.s32.totalorder %s31, 1
        %s746 = scalar_select %p745, %s31, 1
        %s747 = smul.addr %s746, 4
        %s748 = smul.addr %s747, 4
        %s749 = scalar_lea.vmem %s12, %s748
        %p750 = scmp.lt.s32.totalorder %s31, 1
        %s751 = scalar_select %p750, %s31, 1
        %s752 = scalar_lea.vmem %s13, %s751
        %p753 = scmp.lt.s32.totalorder %s31, 1
        %s754 = scalar_select %p753, %s31, 1
        %s755 = smul.addr %s754, 16
        %s756 = smul.addr %s755, 4
        %s757 = scalar_lea.vmem %s14, %s756
        %p758 = scmp.lt.s32.totalorder %s31, 1
        %s759 = scalar_select %p758, %s31, 1
        %s760 = scalar_lea.vmem %s15, %s759
        %p762 = scmp.eq.s32.totalorder %s31, 0
        // Predicated region
        $region97: #{tpu_custom_call.1} parent=95 // pred_check
          %p763 = pneg %p762
        $region98: #{tpu_custom_call.1} parent=95 // pred_check_branch
          %765 = sbr.rel (%p763) target = $region100
        $region99: #{tpu_custom_call.1} parent=95 // pred_region
          %v766 = vld [vmem:[%s0] sm:$0xff]
          %v767 = vld [vmem:[%s0 + $0x8] sm:$0xff]
          %v768 = vld [vmem:[%s1] sm:$0xff]
          %v769 = vadd.f32 %v766, %v768
          %v770 = vadd.f32 %v767, %v768
          %vm771 = vcmask 261120
          %772 = vst.msk [vmem:[#allocation2] sm:$0xff] %vm771, %v769
          %773 = vst.msk [vmem:[#allocation2 + $0x8] sm:$0xff] %vm771, %v770
        $region100: #{tpu_custom_call.1} parent=95 // pred_fallthru
          _
        %v774 = vld [vmem:[#allocation2] sm:$0xff]
        %v775 = vld [vmem:[#allocation2 + $0x8] sm:$0xff]
        %v776 = vld [vmem:[%s2] sm:$0xff]
        %v777 = vld [vmem:[%s719] sm:$0x1]
        %v778 = vld [vmem:[%s722] sm:$0x1]
        %vm779 = vcmask 261120
        %v780 = vsel %vm779, %v774, 0.0
        %781 = vadd.xlane.f32.xlu0 %v780
        %v782 = vpop.xlane.xlu0 %781
        %v783 = vsel %vm779, %v775, 0.0
        %784 = vadd.xlane.f32.xlu0 %v783
        %v785 = vpop.xlane.xlu0 %784
        %v786 = vrcp.pop 32.0
        %v787 = vmul.f32 32.0, %v786
        %v788 = vsub.f32 1.0, %v787
        %v789 = vmul.f32 %v786, %v788
        %v790 = vadd.f32 %v786, %v789
        %vm791 = vweird.f32 %v786
        %v792 = vsel %vm791, %v786, %v790
        %v793 = vmul.f32 %v782, %v792
        %v794 = vmul.f32 %v785, %v792
        %v795 = vsub.f32 %v774, %v793
        %v796 = vsub.f32 %v775, %v794
        %v797 = vmul.f32 %v795, %v795
        %v798 = vmul.f32 %v796, %v796
        %v799 = vsel %vm779, %v797, 0.0
        %800 = vadd.xlane.f32.xlu0 %v799
        %v801 = vpop.xlane.xlu0 %800
        %v802 = vsel %vm779, %v798, 0.0
        %803 = vadd.xlane.f32.xlu0 %v802
        %v804 = vpop.xlane.xlu0 %803
        %v805 = vmul.f32 %v801, %v792
        %v806 = vmul.f32 %v804, %v792
        %v807 = vadd.f32 %v805, 1e-05
        %v808 = vadd.f32 %v806, 1e-05
        %v809 = vrsqrt.pop %v807
        %v810 = vmul.f32 %v809, %v807
        %v811 = vmul.f32 %v810, %v809
        %v812 = vmul.f32 0.5, %v811
        %v813 = vsub.f32 1.5, %v812
        %v814 = vmul.f32 %v809, %v813
        %vm815 = vweird.f32 %v807
        %vm816 = vweird.f32 %v809
        %vm817 = vmor %vm815, %vm816
        %v818 = vsel %vm817, %v809, %v814
        %v819 = vrsqrt.pop %v808
        %v820 = vmul.f32 %v819, %v808
        %v821 = vmul.f32 %v820, %v819
        %v822 = vmul.f32 0.5, %v821
        %v823 = vsub.f32 1.5, %v822
        %v824 = vmul.f32 %v819, %v823
        %vm825 = vweird.f32 %v808
        %vm826 = vweird.f32 %v819
        %vm827 = vmor %vm825, %vm826
        %v828 = vsel %vm827, %v819, %v824
        %v829 = vmul.f32 %v795, %v818
        %v830 = vmul.f32 %v796, %v828
        %v832 = vperm.slane %v777, 0
        %v834 = vmul.f32 %v829, %v832
        %v835 = vmul.f32 %v830, %v832
        %v837 = vperm.slane %v778, 0
        %v839 = vadd.f32 %v834, %v837
        %v840 = vadd.f32 %v835, %v837
        %v841 = vpack.c.bf16 %v840, %v839
        %v842 = vld [vmem:[%s727] sm:$0xf]
        %v843 = vld [vmem:[%s727 + $0x4] sm:$0xf]
        %v844 = vld [vmem:[%s727 + $0x8] sm:$0xf]
        %v845 = vld [vmem:[%s727 + $0xc] sm:$0xf]
        %v846 = vld [vmem:[%s730] sm:$0x1]
        %v848 = vperm.slane %v846, 0
        %v854 = vunpack.c.l.b16 %v842
        %v855 = vunpack.c.l.b16 %v843
        %v856 = vunpack.c.l.b16 %v844
        %v857 = vunpack.c.l.b16 %v845
        %v858 = vpack.c.b16 %v855, %v854
        %v859 = vpack.c.b16 %v857, %v856
        %v863 = vsel %vm779, %v841, 0
        %865 = vmatpush.bf16.msra.mxu0 0
        %866 = vmatpush.bf16.msra.mxu0 0
        %867 = vmatpush.bf16.msra.mxu0 0
        %868 = vmatpush.bf16.msra.mxu0 0
        %869 = vmatpush.bf16.msra.mxu0 0
        %870 = vmatpush.bf16.msra.mxu0 0
        %871 = vmatpush.bf16.msra.mxu0 %v859
        %872 = vmatpush.bf16.msra.mxu0 %v858
        %873 = vmatmul.bf16.gmra.mxu0 %v863
        %v874 = vpop.f32.mrf.mxu0
        %v875 = vadd.f32 %v848, %v874
        %v876 = vpop.f32.mrf.mxu0
        %v877 = vadd.f32 %v848, %v876
        %878 = vdwg.mxu0
        %v879 = vpack.c.bf16 %v875, %v875
        %v880 = vpack.c.bf16 %v877, %v877
        %v882 = vunpack.c.l.b16 %v879
        %v883 = vpack.c.b16 %v882, %v882
        %884 = vrot.lane.b32.xlu0 %v883, 96
        %v885 = vpop.permute.xlu0 %884
        %vm886 = vcmask 64512
        %v888 = vsel %vm886, %v879, 0
        %v891 = vsel %vm886, %v885, 0
        %893 = vmatpush.bf16.xpose.msra.mxu0 0
        %894 = vmatpush.bf16.xpose.msra.mxu0 0
        %895 = vmatpush.bf16.xpose.msra.mxu0 0
        %896 = vmatpush.bf16.xpose.msra.mxu0 0
        %897 = vmatpush.bf16.xpose.msra.mxu0 0
        %898 = vmatpush.bf16.xpose.msra.mxu0 0
        %899 = vmatpush.bf16.xpose.msra.mxu0 0
        %900 = vmatpush.bf16.xpose.msra.mxu0 %v891
        %901 = vmatmul.bf16.gmra.mxu0 %v888
        %v902 = vpop.f32.mrf.mxu0
        %v903 = vadd.f32 0.0, %v902
        %v904 = vpop.f32.mrf.mxu0
        %905 = vdwg.mxu0
        %v907 = vunpack.c.l.b16 %v880
        %v908 = vpack.c.b16 %v907, %v907
        %909 = vrot.lane.b32.xlu0 %v908, 96
        %v910 = vpop.permute.xlu0 %909
        %v912 = vsel %vm886, %v880, 0
        %v915 = vsel %vm886, %v910, 0
        %917 = vmatpush.bf16.xpose.msra.mxu0 0
        %918 = vmatpush.bf16.xpose.msra.mxu0 0
        %919 = vmatpush.bf16.xpose.msra.mxu0 0
        %920 = vmatpush.bf16.xpose.msra.mxu0 0
        %921 = vmatpush.bf16.xpose.msra.mxu0 0
        %922 = vmatpush.bf16.xpose.msra.mxu0 0
        %923 = vmatpush.bf16.xpose.msra.mxu0 0
        %924 = vmatpush.bf16.xpose.msra.mxu0 %v915
        %925 = vmatmul.bf16.gmra.mxu0 %v912
        %v926 = vpop.f32.mrf.mxu0
        %v927 = vadd.f32 0.0, %v926
        %v928 = vpop.f32.mrf.mxu0
        %929 = vdwg.mxu0
        %v930 = vmul.f32 %v903, 0.35355338
        %v931 = vmul.f32 %v927, 0.35355338
        %v932 = vadd.f32 %v930, %v776
        %v933 = vadd.f32 %v931, %v776
        %v934 = vsel %vm886, %v932, -inf
        %935 = vmax.xlane.f32.xlu0 %v934
        %v936 = vpop.xlane.xlu0 %935
        %v937 = vsel %vm886, %v933, -inf
        %938 = vmax.xlane.f32.xlu0 %v937
        %v939 = vpop.xlane.xlu0 %938
        %v940 = vsub.f32 %v932, %v936
        %v941 = vsub.f32 %v933, %v939
        %v942 = vmul.f32 %v940, 1.442695
        %v943 = vpow.pop %v942
        %v944 = vmul.f32 %v941, 1.442695
        %v945 = vpow.pop %v944
        %v946 = vsel %vm886, %v943, 0.0
        %947 = vadd.xlane.f32.xlu0 %v946
        %v948 = vpop.xlane.xlu0 %947
        %v949 = vsel %vm886, %v945, 0.0
        %950 = vadd.xlane.f32.xlu0 %v949
        %v951 = vpop.xlane.xlu0 %950
        %v952 = vrcp.pop %v948
        %v953 = vmul.f32 %v948, %v952
        %v954 = vsub.f32 1.0, %v953
        %v955 = vmul.f32 %v952, %v954
        %v956 = vadd.f32 %v952, %v955
        %vm957 = vweird.f32 %v948
        %vm958 = vweird.f32 %v952
        %vm959 = vmor %vm957, %vm958
        %v960 = vsel %vm959, %v952, %v956
        %v961 = vand.u32 2147483647, %v948
        %vm962 = vcmp.eq.f32.partialorder %v961, 8.507059e+37
        %v963 = vand.u32 %v948, 2147483648
        %v964 = vor.u32 1.1754944e-38, %v963
        %v965 = vsel %vm962, %v964, %v960
        %v966 = vmul.f32 %v943, %v965
        %v967 = vrcp.pop %v951
        %v968 = vmul.f32 %v951, %v967
        %v969 = vsub.f32 1.0, %v968
        %v970 = vmul.f32 %v967, %v969
        %v971 = vadd.f32 %v967, %v970
        %vm972 = vweird.f32 %v951
        %vm973 = vweird.f32 %v967
        %vm974 = vmor %vm972, %vm973
        %v975 = vsel %vm974, %v967, %v971
        %v976 = vand.u32 2147483647, %v951
        %vm977 = vcmp.eq.f32.partialorder %v976, 8.507059e+37
        %v978 = vand.u32 %v951, 2147483648
        %v979 = vor.u32 1.1754944e-38, %v978
        %v980 = vsel %vm977, %v979, %v975
        %v981 = vmul.f32 %v945, %v980
        %v982 = vpack.c.bf16 %v966, %v966
        %v983 = vpack.c.bf16 %v981, %v981
        %984 = vrot.lane.b32.xlu0 %v883, 64
        %v985 = vpop.permute.xlu0 %984
        %v987 = vsel %vm886, %v982, 0
        %vm989 = vcmask 1043456
        %v991 = vsel %vm989, %v985, 0
        %993 = vmatpush.bf16.msra.mxu0 0
        %994 = vmatpush.bf16.msra.mxu0 0
        %995 = vmatpush.bf16.msra.mxu0 0
        %996 = vmatpush.bf16.msra.mxu0 0
        %997 = vmatpush.bf16.msra.mxu0 0
        %998 = vmatpush.bf16.msra.mxu0 0
        %999 = vmatpush.bf16.msra.mxu0 0
        %1000 = vmatpush.bf16.msra.mxu0 %v991
        %1001 = vmatmul.bf16.gmra.mxu0 %v987
        %v1002 = vpop.f32.mrf.mxu0
        %v1003 = vadd.f32 0.0, %v1002
        %v1004 = vpop.f32.mrf.mxu0
        %1005 = vdwg.mxu0
        %1006 = vrot.lane.b32.xlu0 %v908, 64
        %v1007 = vpop.permute.xlu0 %1006
        %v1009 = vsel %vm886, %v983, 0
        %v1012 = vsel %vm989, %v1007, 0
        %1014 = vmatpush.bf16.msra.mxu0 0
        %1015 = vmatpush.bf16.msra.mxu0 0
        %1016 = vmatpush.bf16.msra.mxu0 0
        %1017 = vmatpush.bf16.msra.mxu0 0
        %1018 = vmatpush.bf16.msra.mxu0 0
        %1019 = vmatpush.bf16.msra.mxu0 0
        %1020 = vmatpush.bf16.msra.mxu0 0
        %1021 = vmatpush.bf16.msra.mxu0 %v1012
        %1022 = vmatmul.bf16.gmra.mxu0 %v1009
        %v1023 = vpop.f32.mrf.mxu0
        %v1024 = vadd.f32 0.0, %v1023
        %v1025 = vpop.f32.mrf.mxu0
        %1026 = vdwg.mxu0
        %1027 = vrot.lane.b32.xlu0 %v883, 120
        %v1028 = vpop.permute.xlu0 %1027
        %1029 = vrot.lane.b32.xlu0 %v883, 88
        %v1030 = vpop.permute.xlu0 %1029
        %v1032 = vsel %vm886, %v1028, 0
        %v1035 = vsel %vm886, %v1030, 0
        %1037 = vmatpush.bf16.xpose.msra.mxu0 0
        %1038 = vmatpush.bf16.xpose.msra.mxu0 0
        %1039 = vmatpush.bf16.xpose.msra.mxu0 0
        %1040 = vmatpush.bf16.xpose.msra.mxu0 0
        %1041 = vmatpush.bf16.xpose.msra.mxu0 0
        %1042 = vmatpush.bf16.xpose.msra.mxu0 0
        %1043 = vmatpush.bf16.xpose.msra.mxu0 0
        %1044 = vmatpush.bf16.xpose.msra.mxu0 %v1035
        %1045 = vmatmul.bf16.gmra.mxu0 %v1032
        %v1046 = vpop.f32.mrf.mxu0
        %v1047 = vadd.f32 0.0, %v1046
        %v1048 = vpop.f32.mrf.mxu0
        %1049 = vdwg.mxu0
        %1050 = vrot.lane.b32.xlu0 %v908, 120
        %v1051 = vpop.permute.xlu0 %1050
        %1052 = vrot.lane.b32.xlu0 %v908, 88
        %v1053 = vpop.permute.xlu0 %1052
        %v1055 = vsel %vm886, %v1051, 0
        %v1058 = vsel %vm886, %v1053, 0
        %1060 = vmatpush.bf16.xpose.msra.mxu0 0
        %1061 = vmatpush.bf16.xpose.msra.mxu0 0
        %1062 = vmatpush.bf16.xpose.msra.mxu0 0
        %1063 = vmatpush.bf16.xpose.msra.mxu0 0
        %1064 = vmatpush.bf16.xpose.msra.mxu0 0
        %1065 = vmatpush.bf16.xpose.msra.mxu0 0
        %1066 = vmatpush.bf16.xpose.msra.mxu0 0
        %1067 = vmatpush.bf16.xpose.msra.mxu0 %v1058
        %1068 = vmatmul.bf16.gmra.mxu0 %v1055
        %v1069 = vpop.f32.mrf.mxu0
        %v1070 = vadd.f32 0.0, %v1069
        %v1071 = vpop.f32.mrf.mxu0
        %1072 = vdwg.mxu0
        %v1073 = vmul.f32 %v1047, 0.35355338
        %v1074 = vmul.f32 %v1070, 0.35355338
        %v1075 = vadd.f32 %v1073, %v776
        %v1076 = vadd.f32 %v1074, %v776
        %v1077 = vsel %vm886, %v1075, -inf
        %1078 = vmax.xlane.f32.xlu0 %v1077
        %v1079 = vpop.xlane.xlu0 %1078
        %v1080 = vsel %vm886, %v1076, -inf
        %1081 = vmax.xlane.f32.xlu0 %v1080
        %v1082 = vpop.xlane.xlu0 %1081
        %v1083 = vsub.f32 %v1075, %v1079
        %v1084 = vsub.f32 %v1076, %v1082
        %v1085 = vmul.f32 %v1083, 1.442695
        %v1086 = vpow.pop %v1085
        %v1087 = vmul.f32 %v1084, 1.442695
        %v1088 = vpow.pop %v1087
        %v1089 = vsel %vm886, %v1086, 0.0
        %1090 = vadd.xlane.f32.xlu0 %v1089
        %v1091 = vpop.xlane.xlu0 %1090
        %v1092 = vsel %vm886, %v1088, 0.0
        %1093 = vadd.xlane.f32.xlu0 %v1092
        %v1094 = vpop.xlane.xlu0 %1093
        %v1095 = vrcp.pop %v1091
        %v1096 = vmul.f32 %v1091, %v1095
        %v1097 = vsub.f32 1.0, %v1096
        %v1098 = vmul.f32 %v1095, %v1097
        %v1099 = vadd.f32 %v1095, %v1098
        %vm1100 = vweird.f32 %v1091
        %vm1101 = vweird.f32 %v1095
        %vm1102 = vmor %vm1100, %vm1101
        %v1103 = vsel %vm1102, %v1095, %v1099
        %v1104 = vand.u32 2147483647, %v1091
        %vm1105 = vcmp.eq.f32.partialorder %v1104, 8.507059e+37
        %v1106 = vand.u32 %v1091, 2147483648
        %v1107 = vor.u32 1.1754944e-38, %v1106
        %v1108 = vsel %vm1105, %v1107, %v1103
        %v1109 = vmul.f32 %v1086, %v1108
        %v1110 = vrcp.pop %v1094
        %v1111 = vmul.f32 %v1094, %v1110
        %v1112 = vsub.f32 1.0, %v1111
        %v1113 = vmul.f32 %v1110, %v1112
        %v1114 = vadd.f32 %v1110, %v1113
        %vm1115 = vweird.f32 %v1094
        %vm1116 = vweird.f32 %v1110
        %vm1117 = vmor %vm1115, %vm1116
        %v1118 = vsel %vm1117, %v1110, %v1114
        %v1119 = vand.u32 2147483647, %v1094
        %vm1120 = vcmp.eq.f32.partialorder %v1119, 8.507059e+37
        %v1121 = vand.u32 %v1094, 2147483648
        %v1122 = vor.u32 1.1754944e-38, %v1121
        %v1123 = vsel %vm1120, %v1122, %v1118
        %v1124 = vmul.f32 %v1088, %v1123
        %v1125 = vpack.c.bf16 %v1109, %v1109
        %v1126 = vpack.c.bf16 %v1124, %v1124
        %1127 = vrot.lane.b32.xlu0 %v883, 56
        %v1128 = vpop.permute.xlu0 %1127
        %v1130 = vsel %vm886, %v1125, 0
        %v1133 = vsel %vm989, %v1128, 0
        %1135 = vmatpush.bf16.msra.mxu0 0
        %1136 = vmatpush.bf16.msra.mxu0 0
        %1137 = vmatpush.bf16.msra.mxu0 0
        %1138 = vmatpush.bf16.msra.mxu0 0
        %1139 = vmatpush.bf16.msra.mxu0 0
        %1140 = vmatpush.bf16.msra.mxu0 0
        %1141 = vmatpush.bf16.msra.mxu0 0
        %1142 = vmatpush.bf16.msra.mxu0 %v1133
        %1143 = vmatmul.bf16.gmra.mxu0 %v1130
        %v1144 = vpop.f32.mrf.mxu0
        %v1145 = vadd.f32 0.0, %v1144
        %v1146 = vpop.f32.mrf.mxu0
        %1147 = vdwg.mxu0
        %1148 = vrot.lane.b32.xlu0 %v908, 56
        %v1149 = vpop.permute.xlu0 %1148
        %v1151 = vsel %vm886, %v1126, 0
        %v1154 = vsel %vm989, %v1149, 0
        %1156 = vmatpush.bf16.msra.mxu0 0
        %1157 = vmatpush.bf16.msra.mxu0 0
        %1158 = vmatpush.bf16.msra.mxu0 0
        %1159 = vmatpush.bf16.msra.mxu0 0
        %1160 = vmatpush.bf16.msra.mxu0 0
        %1161 = vmatpush.bf16.msra.mxu0 0
        %1162 = vmatpush.bf16.msra.mxu0 0
        %1163 = vmatpush.bf16.msra.mxu0 %v1154
        %1164 = vmatmul.bf16.gmra.mxu0 %v1151
        %v1165 = vpop.f32.mrf.mxu0
        %v1166 = vadd.f32 0.0, %v1165
        %v1167 = vpop.f32.mrf.mxu0
        %1168 = vdwg.mxu0
        %1169 = vrot.lane.b32.xlu0 %v883, 112
        %v1170 = vpop.permute.xlu0 %1169
        %1171 = vrot.lane.b32.xlu0 %v883, 80
        %v1172 = vpop.permute.xlu0 %1171
        %v1174 = vsel %vm886, %v1170, 0
        %v1177 = vsel %vm886, %v1172, 0
        %1179 = vmatpush.bf16.xpose.msra.mxu0 0
        %1180 = vmatpush.bf16.xpose.msra.mxu0 0
        %1181 = vmatpush.bf16.xpose.msra.mxu0 0
        %1182 = vmatpush.bf16.xpose.msra.mxu0 0
        %1183 = vmatpush.bf16.xpose.msra.mxu0 0
        %1184 = vmatpush.bf16.xpose.msra.mxu0 0
        %1185 = vmatpush.bf16.xpose.msra.mxu0 0
        %1186 = vmatpush.bf16.xpose.msra.mxu0 %v1177
        %1187 = vmatmul.bf16.gmra.mxu0 %v1174
        %v1188 = vpop.f32.mrf.mxu0
        %v1189 = vadd.f32 0.0, %v1188
        %v1190 = vpop.f32.mrf.mxu0
        %1191 = vdwg.mxu0
        %1192 = vrot.lane.b32.xlu0 %v908, 112
        %v1193 = vpop.permute.xlu0 %1192
        %1194 = vrot.lane.b32.xlu0 %v908, 80
        %v1195 = vpop.permute.xlu0 %1194
        %v1197 = vsel %vm886, %v1193, 0
        %v1200 = vsel %vm886, %v1195, 0
        %1202 = vmatpush.bf16.xpose.msra.mxu0 0
        %1203 = vmatpush.bf16.xpose.msra.mxu0 0
        %1204 = vmatpush.bf16.xpose.msra.mxu0 0
        %1205 = vmatpush.bf16.xpose.msra.mxu0 0
        %1206 = vmatpush.bf16.xpose.msra.mxu0 0
        %1207 = vmatpush.bf16.xpose.msra.mxu0 0
        %1208 = vmatpush.bf16.xpose.msra.mxu0 0
        %1209 = vmatpush.bf16.xpose.msra.mxu0 %v1200
        %1210 = vmatmul.bf16.gmra.mxu0 %v1197
        %v1211 = vpop.f32.mrf.mxu0
        %v1212 = vadd.f32 0.0, %v1211
        %v1213 = vpop.f32.mrf.mxu0
        %1214 = vdwg.mxu0
        %v1215 = vmul.f32 %v1189, 0.35355338
        %v1216 = vmul.f32 %v1212, 0.35355338
        %v1217 = vadd.f32 %v1215, %v776
        %v1218 = vadd.f32 %v1216, %v776
        %v1219 = vsel %vm886, %v1217, -inf
        %1220 = vmax.xlane.f32.xlu0 %v1219
        %v1221 = vpop.xlane.xlu0 %1220
        %v1222 = vsel %vm886, %v1218, -inf
        %1223 = vmax.xlane.f32.xlu0 %v1222
        %v1224 = vpop.xlane.xlu0 %1223
        %v1225 = vsub.f32 %v1217, %v1221
        %v1226 = vsub.f32 %v1218, %v1224
        %v1227 = vmul.f32 %v1225, 1.442695
        %v1228 = vpow.pop %v1227
        %v1229 = vmul.f32 %v1226, 1.442695
        %v1230 = vpow.pop %v1229
        %v1231 = vsel %vm886, %v1228, 0.0
        %1232 = vadd.xlane.f32.xlu0 %v1231
        %v1233 = vpop.xlane.xlu0 %1232
        %v1234 = vsel %vm886, %v1230, 0.0
        %1235 = vadd.xlane.f32.xlu0 %v1234
        %v1236 = vpop.xlane.xlu0 %1235
        %v1237 = vrcp.pop %v1233
        %v1238 = vmul.f32 %v1233, %v1237
        %v1239 = vsub.f32 1.0, %v1238
        %v1240 = vmul.f32 %v1237, %v1239
        %v1241 = vadd.f32 %v1237, %v1240
        %vm1242 = vweird.f32 %v1233
        %vm1243 = vweird.f32 %v1237
        %vm1244 = vmor %vm1242, %vm1243
        %v1245 = vsel %vm1244, %v1237, %v1241
        %v1246 = vand.u32 2147483647, %v1233
        %vm1247 = vcmp.eq.f32.partialorder %v1246, 8.507059e+37
        %v1248 = vand.u32 %v1233, 2147483648
        %v1249 = vor.u32 1.1754944e-38, %v1248
        %v1250 = vsel %vm1247, %v1249, %v1245
        %v1251 = vmul.f32 %v1228, %v1250
        %v1252 = vrcp.pop %v1236
        %v1253 = vmul.f32 %v1236, %v1252
        %v1254 = vsub.f32 1.0, %v1253
        %v1255 = vmul.f32 %v1252, %v1254
        %v1256 = vadd.f32 %v1252, %v1255
        %vm1257 = vweird.f32 %v1236
        %vm1258 = vweird.f32 %v1252
        %vm1259 = vmor %vm1257, %vm1258
        %v1260 = vsel %vm1259, %v1252, %v1256
        %v1261 = vand.u32 2147483647, %v1236
        %vm1262 = vcmp.eq.f32.partialorder %v1261, 8.507059e+37
        %v1263 = vand.u32 %v1236, 2147483648
        %v1264 = vor.u32 1.1754944e-38, %v1263
        %v1265 = vsel %vm1262, %v1264, %v1260
        %v1266 = vmul.f32 %v1230, %v1265
        %v1267 = vpack.c.bf16 %v1251, %v1251
        %v1268 = vpack.c.bf16 %v1266, %v1266
        %1269 = vrot.lane.b32.xlu0 %v883, 48
        %v1270 = vpop.permute.xlu0 %1269
        %v1272 = vsel %vm886, %v1267, 0
        %v1275 = vsel %vm989, %v1270, 0
        %1277 = vmatpush.bf16.msra.mxu0 0
        %1278 = vmatpush.bf16.msra.mxu0 0
        %1279 = vmatpush.bf16.msra.mxu0 0
        %1280 = vmatpush.bf16.msra.mxu0 0
        %1281 = vmatpush.bf16.msra.mxu0 0
        %1282 = vmatpush.bf16.msra.mxu0 0
        %1283 = vmatpush.bf16.msra.mxu0 0
        %1284 = vmatpush.bf16.msra.mxu0 %v1275
        %1285 = vmatmul.bf16.gmra.mxu0 %v1272
        %v1286 = vpop.f32.mrf.mxu0
        %v1287 = vadd.f32 0.0, %v1286
        %v1288 = vpop.f32.mrf.mxu0
        %1289 = vdwg.mxu0
        %1290 = vrot.lane.b32.xlu0 %v908, 48
        %v1291 = vpop.permute.xlu0 %1290
        %v1293 = vsel %vm886, %v1268, 0
        %v1296 = vsel %vm989, %v1291, 0
        %1298 = vmatpush.bf16.msra.mxu0 0
        %1299 = vmatpush.bf16.msra.mxu0 0
        %1300 = vmatpush.bf16.msra.mxu0 0
        %1301 = vmatpush.bf16.msra.mxu0 0
        %1302 = vmatpush.bf16.msra.mxu0 0
        %1303 = vmatpush.bf16.msra.mxu0 0
        %1304 = vmatpush.bf16.msra.mxu0 0
        %1305 = vmatpush.bf16.msra.mxu0 %v1296
        %1306 = vmatmul.bf16.gmra.mxu0 %v1293
        %v1307 = vpop.f32.mrf.mxu0
        %v1308 = vadd.f32 0.0, %v1307
        %v1309 = vpop.f32.mrf.mxu0
        %1310 = vdwg.mxu0
        %1311 = vrot.lane.b32.xlu0 %v883, 104
        %v1312 = vpop.permute.xlu0 %1311
        %1313 = vrot.lane.b32.xlu0 %v883, 72
        %v1314 = vpop.permute.xlu0 %1313
        %v1316 = vsel %vm886, %v1312, 0
        %v1319 = vsel %vm886, %v1314, 0
        %1321 = vmatpush.bf16.xpose.msra.mxu0 0
        %1322 = vmatpush.bf16.xpose.msra.mxu0 0
        %1323 = vmatpush.bf16.xpose.msra.mxu0 0
        %1324 = vmatpush.bf16.xpose.msra.mxu0 0
        %1325 = vmatpush.bf16.xpose.msra.mxu0 0
        %1326 = vmatpush.bf16.xpose.msra.mxu0 0
        %1327 = vmatpush.bf16.xpose.msra.mxu0 0
        %1328 = vmatpush.bf16.xpose.msra.mxu0 %v1319
        %1329 = vmatmul.bf16.gmra.mxu0 %v1316
        %v1330 = vpop.f32.mrf.mxu0
        %v1331 = vadd.f32 0.0, %v1330
        %v1332 = vpop.f32.mrf.mxu0
        %1333 = vdwg.mxu0
        %1334 = vrot.lane.b32.xlu0 %v908, 104
        %v1335 = vpop.permute.xlu0 %1334
        %1336 = vrot.lane.b32.xlu0 %v908, 72
        %v1337 = vpop.permute.xlu0 %1336
        %v1339 = vsel %vm886, %v1335, 0
        %v1342 = vsel %vm886, %v1337, 0
        %1344 = vmatpush.bf16.xpose.msra.mxu0 0
        %1345 = vmatpush.bf16.xpose.msra.mxu0 0
        %1346 = vmatpush.bf16.xpose.msra.mxu0 0
        %1347 = vmatpush.bf16.xpose.msra.mxu0 0
        %1348 = vmatpush.bf16.xpose.msra.mxu0 0
        %1349 = vmatpush.bf16.xpose.msra.mxu0 0
        %1350 = vmatpush.bf16.xpose.msra.mxu0 0
        %1351 = vmatpush.bf16.xpose.msra.mxu0 %v1342
        %1352 = vmatmul.bf16.gmra.mxu0 %v1339
        %v1353 = vpop.f32.mrf.mxu0
        %v1354 = vadd.f32 0.0, %v1353
        %v1355 = vpop.f32.mrf.mxu0
        %1356 = vdwg.mxu0
        %v1357 = vmul.f32 %v1331, 0.35355338
        %v1358 = vmul.f32 %v1354, 0.35355338
        %v1359 = vadd.f32 %v1357, %v776
        %v1360 = vadd.f32 %v1358, %v776
        %v1361 = vsel %vm886, %v1359, -inf
        %1362 = vmax.xlane.f32.xlu0 %v1361
        %v1363 = vpop.xlane.xlu0 %1362
        %v1364 = vsel %vm886, %v1360, -inf
        %1365 = vmax.xlane.f32.xlu0 %v1364
        %v1366 = vpop.xlane.xlu0 %1365
        %v1367 = vsub.f32 %v1359, %v1363
        %v1368 = vsub.f32 %v1360, %v1366
        %v1369 = vmul.f32 %v1367, 1.442695
        %v1370 = vpow.pop %v1369
        %v1371 = vmul.f32 %v1368, 1.442695
        %v1372 = vpow.pop %v1371
        %v1373 = vsel %vm886, %v1370, 0.0
        %1374 = vadd.xlane.f32.xlu0 %v1373
        %v1375 = vpop.xlane.xlu0 %1374
        %v1376 = vsel %vm886, %v1372, 0.0
        %1377 = vadd.xlane.f32.xlu0 %v1376
        %v1378 = vpop.xlane.xlu0 %1377
        %v1379 = vrcp.pop %v1375
        %v1380 = vmul.f32 %v1375, %v1379
        %v1381 = vsub.f32 1.0, %v1380
        %v1382 = vmul.f32 %v1379, %v1381
        %v1383 = vadd.f32 %v1379, %v1382
        %vm1384 = vweird.f32 %v1375
        %vm1385 = vweird.f32 %v1379
        %vm1386 = vmor %vm1384, %vm1385
        %v1387 = vsel %vm1386, %v1379, %v1383
        %v1388 = vand.u32 2147483647, %v1375
        %vm1389 = vcmp.eq.f32.partialorder %v1388, 8.507059e+37
        %v1390 = vand.u32 %v1375, 2147483648
        %v1391 = vor.u32 1.1754944e-38, %v1390
        %v1392 = vsel %vm1389, %v1391, %v1387
        %v1393 = vmul.f32 %v1370, %v1392
        %v1394 = vrcp.pop %v1378
        %v1395 = vmul.f32 %v1378, %v1394
        %v1396 = vsub.f32 1.0, %v1395
        %v1397 = vmul.f32 %v1394, %v1396
        %v1398 = vadd.f32 %v1394, %v1397
        %vm1399 = vweird.f32 %v1378
        %vm1400 = vweird.f32 %v1394
        %vm1401 = vmor %vm1399, %vm1400
        %v1402 = vsel %vm1401, %v1394, %v1398
        %v1403 = vand.u32 2147483647, %v1378
        %vm1404 = vcmp.eq.f32.partialorder %v1403, 8.507059e+37
        %v1405 = vand.u32 %v1378, 2147483648
        %v1406 = vor.u32 1.1754944e-38, %v1405
        %v1407 = vsel %vm1404, %v1406, %v1402
        %v1408 = vmul.f32 %v1372, %v1407
        %v1409 = vpack.c.bf16 %v1393, %v1393
        %v1410 = vpack.c.bf16 %v1408, %v1408
        %1411 = vrot.lane.b32.xlu0 %v883, 40
        %v1412 = vpop.permute.xlu0 %1411
        %v1414 = vsel %vm886, %v1409, 0
        %v1417 = vsel %vm989, %v1412, 0
        %1419 = vmatpush.bf16.msra.mxu0 0
        %1420 = vmatpush.bf16.msra.mxu0 0
        %1421 = vmatpush.bf16.msra.mxu0 0
        %1422 = vmatpush.bf16.msra.mxu0 0
        %1423 = vmatpush.bf16.msra.mxu0 0
        %1424 = vmatpush.bf16.msra.mxu0 0
        %1425 = vmatpush.bf16.msra.mxu0 0
        %1426 = vmatpush.bf16.msra.mxu0 %v1417
        %1427 = vmatmul.bf16.gmra.mxu0 %v1414
        %v1428 = vpop.f32.mrf.mxu0
        %v1429 = vadd.f32 0.0, %v1428
        %v1430 = vpop.f32.mrf.mxu0
        %1431 = vdwg.mxu0
        %1432 = vrot.lane.b32.xlu0 %v908, 40
        %v1433 = vpop.permute.xlu0 %1432
        %v1435 = vsel %vm886, %v1410, 0
        %v1438 = vsel %vm989, %v1433, 0
        %1440 = vmatpush.bf16.msra.mxu0 0
        %1441 = vmatpush.bf16.msra.mxu0 0
        %1442 = vmatpush.bf16.msra.mxu0 0
        %1443 = vmatpush.bf16.msra.mxu0 0
        %1444 = vmatpush.bf16.msra.mxu0 0
        %1445 = vmatpush.bf16.msra.mxu0 0
        %1446 = vmatpush.bf16.msra.mxu0 0
        %1447 = vmatpush.bf16.msra.mxu0 %v1438
        %1448 = vmatmul.bf16.gmra.mxu0 %v1435
        %v1449 = vpop.f32.mrf.mxu0
        %v1450 = vadd.f32 0.0, %v1449
        %v1451 = vpop.f32.mrf.mxu0
        %1452 = vdwg.mxu0
        %1455 = vrot.lane.b32.xlu0 %v1145, 8
        %v1456 = vpop.permute.xlu0 %1455
        %1457 = vrot.lane.b32.xlu0 %v1166, 8
        %v1458 = vpop.permute.xlu0 %1457
        %1463 = vrot.lane.b32.xlu0 %v1287, 16
        %v1464 = vpop.permute.xlu0 %1463
        %1465 = vrot.lane.b32.xlu0 %v1308, 16
        %v1466 = vpop.permute.xlu0 %1465
        %1471 = vrot.lane.b32.xlu0 %v1429, 24
        %v1472 = vpop.permute.xlu0 %1471
        %1473 = vrot.lane.b32.xlu0 %v1450, 24
        %v1474 = vpop.permute.xlu0 %1473
        %v1477 = vsel %vm886, %v1003, %v1456
        %v1478 = vsel %vm886, %v1024, %v1458
        %vm1479 = vcmask 130048
        %v1480 = vsel %vm1479, %v1477, %v1464
        %v1481 = vsel %vm1479, %v1478, %v1466
        %vm1482 = vcmask 195584
        %v1483 = vsel %vm1482, %v1480, %v1472
        %v1484 = vsel %vm1482, %v1481, %v1474
        %v1485 = vpack.c.bf16 %v1484, %v1483
        %v1486 = vld [vmem:[%s735] sm:$0xf]
        %v1487 = vld [vmem:[%s735 + $0x4] sm:$0xf]
        %v1488 = vld [vmem:[%s735 + $0x8] sm:$0xf]
        %v1489 = vld [vmem:[%s735 + $0xc] sm:$0xf]
        %v1490 = vld [vmem:[%s738] sm:$0x1]
        %v1492 = vperm.slane %v1490, 0
        %v1498 = vunpack.c.l.b16 %v1486
        %v1499 = vunpack.c.l.b16 %v1487
        %v1500 = vunpack.c.l.b16 %v1488
        %v1501 = vunpack.c.l.b16 %v1489
        %v1502 = vpack.c.b16 %v1499, %v1498
        %v1503 = vpack.c.b16 %v1501, %v1500
        %v1507 = vsel %vm779, %v1485, 0
        %1509 = vmatpush.bf16.msra.mxu0 0
        %1510 = vmatpush.bf16.msra.mxu0 0
        %1511 = vmatpush.bf16.msra.mxu0 0
        %1512 = vmatpush.bf16.msra.mxu0 0
        %1513 = vmatpush.bf16.msra.mxu0 0
        %1514 = vmatpush.bf16.msra.mxu0 0
        %1515 = vmatpush.bf16.msra.mxu0 %v1503
        %1516 = vmatpush.bf16.msra.mxu0 %v1502
        %1517 = vmatmul.bf16.gmra.mxu0 %v1507
        %v1518 = vpop.f32.mrf.mxu0
        %v1519 = vadd.f32 %v1492, %v1518
        %v1520 = vpop.f32.mrf.mxu0
        %v1521 = vadd.f32 %v1492, %v1520
        %1522 = vdwg.mxu0
        %v1523 = vadd.f32 %v774, %v1519
        %v1524 = vadd.f32 %v775, %v1521
        %v1525 = vld [vmem:[%s741] sm:$0x1]
        %v1526 = vld [vmem:[%s744] sm:$0x1]
        %v1527 = vsel %vm779, %v1523, 0.0
        %1528 = vadd.xlane.f32.xlu0 %v1527
        %v1529 = vpop.xlane.xlu0 %1528
        %v1530 = vsel %vm779, %v1524, 0.0
        %1531 = vadd.xlane.f32.xlu0 %v1530
        %v1532 = vpop.xlane.xlu0 %1531
        %v1533 = vmul.f32 %v1529, %v792
        %v1534 = vmul.f32 %v1532, %v792
        %v1535 = vsub.f32 %v1523, %v1533
        %v1536 = vsub.f32 %v1524, %v1534
        %v1537 = vmul.f32 %v1535, %v1535
        %v1538 = vmul.f32 %v1536, %v1536
        %v1539 = vsel %vm779, %v1537, 0.0
        %1540 = vadd.xlane.f32.xlu0 %v1539
        %v1541 = vpop.xlane.xlu0 %1540
        %v1542 = vsel %vm779, %v1538, 0.0
        %1543 = vadd.xlane.f32.xlu0 %v1542
        %v1544 = vpop.xlane.xlu0 %1543
        %v1545 = vmul.f32 %v1541, %v792
        %v1546 = vmul.f32 %v1544, %v792
        %v1547 = vadd.f32 %v1545, 1e-05
        %v1548 = vadd.f32 %v1546, 1e-05
        %v1549 = vrsqrt.pop %v1547
        %v1550 = vmul.f32 %v1549, %v1547
        %v1551 = vmul.f32 %v1550, %v1549
        %v1552 = vmul.f32 0.5, %v1551
        %v1553 = vsub.f32 1.5, %v1552
        %v1554 = vmul.f32 %v1549, %v1553
        %vm1555 = vweird.f32 %v1547
        %vm1556 = vweird.f32 %v1549
        %vm1557 = vmor %vm1555, %vm1556
        %v1558 = vsel %vm1557, %v1549, %v1554
        %v1559 = vrsqrt.pop %v1548
        %v1560 = vmul.f32 %v1559, %v1548
        %v1561 = vmul.f32 %v1560, %v1559
        %v1562 = vmul.f32 0.5, %v1561
        %v1563 = vsub.f32 1.5, %v1562
        %v1564 = vmul.f32 %v1559, %v1563
        %vm1565 = vweird.f32 %v1548
        %vm1566 = vweird.f32 %v1559
        %vm1567 = vmor %vm1565, %vm1566
        %v1568 = vsel %vm1567, %v1559, %v1564
        %v1569 = vmul.f32 %v1535, %v1558
        %v1570 = vmul.f32 %v1536, %v1568
        %v1572 = vperm.slane %v1525, 0
        %v1574 = vmul.f32 %v1569, %v1572
        %v1575 = vmul.f32 %v1570, %v1572
        %v1577 = vperm.slane %v1526, 0
        %v1579 = vadd.f32 %v1574, %v1577
        %v1580 = vadd.f32 %v1575, %v1577
        %v1581 = vpack.c.bf16 %v1580, %v1579
        %v1582 = vld [vmem:[%s749] sm:$0xf]
        %v1583 = vld [vmem:[%s749 + $0x4] sm:$0xf]
        %v1584 = vld [vmem:[%s749 + $0x8] sm:$0xf]
        %v1585 = vld [vmem:[%s749 + $0xc] sm:$0xf]
        %v1586 = vld [vmem:[%s752] sm:$0x1]
        %v1588 = vperm.slane %v1586, 0
        %v1594 = vunpack.c.l.b16 %v1582
        %v1595 = vunpack.c.l.b16 %v1583
        %v1596 = vunpack.c.l.b16 %v1584
        %v1597 = vunpack.c.l.b16 %v1585
        %v1598 = vpack.c.b16 %v1595, %v1594
        %v1599 = vpack.c.b16 %v1597, %v1596
        %v1603 = vsel %vm779, %v1581, 0
        %1605 = vmatpush.bf16.msra.mxu0 0
        %1606 = vmatpush.bf16.msra.mxu0 0
        %1607 = vmatpush.bf16.msra.mxu0 0
        %1608 = vmatpush.bf16.msra.mxu0 0
        %1609 = vmatpush.bf16.msra.mxu0 0
        %1610 = vmatpush.bf16.msra.mxu0 0
        %1611 = vmatpush.bf16.msra.mxu0 %v1599
        %1612 = vmatpush.bf16.msra.mxu0 %v1598
        %1613 = vmatmul.bf16.gmra.mxu0 %v1603
        %v1614 = vpop.f32.mrf.mxu0
        %v1615 = vadd.f32 %v1588, %v1614
        %v1616 = vpop.f32.mrf.mxu0
        %v1617 = vadd.f32 %v1588, %v1616
        %1618 = vdwg.mxu0
        %v1619 = vmul.f32 %v1615, 1.702
        %v1620 = vmul.f32 %v1617, 1.702
        %v1621 = vxor.u32 %v1619, 2147483648
        %v1622 = vxor.u32 %v1620, 2147483648
        %v1623 = vmul.f32 %v1621, 1.442695
        %v1624 = vpow.pop %v1623
        %v1625 = vmul.f32 %v1622, 1.442695
        %v1626 = vpow.pop %v1625
        %v1627 = vadd.f32 %v1624, 1.0
        %v1628 = vadd.f32 %v1626, 1.0
        %v1629 = vrcp.pop %v1627
        %v1630 = vmul.f32 %v1627, %v1629
        %v1631 = vsub.f32 1.0, %v1630
        %v1632 = vmul.f32 %v1629, %v1631
        %v1633 = vadd.f32 %v1629, %v1632
        %vm1634 = vweird.f32 %v1627
        %vm1635 = vweird.f32 %v1629
        %vm1636 = vmor %vm1634, %vm1635
        %v1637 = vsel %vm1636, %v1629, %v1633
        %v1638 = vand.u32 2147483647, %v1627
        %vm1639 = vcmp.eq.f32.partialorder %v1638, 8.507059e+37
        %v1640 = vand.u32 %v1627, 2147483648
        %v1641 = vor.u32 1.1754944e-38, %v1640
        %v1642 = vsel %vm1639, %v1641, %v1637
        %v1643 = vmul.f32 1.0, %v1642
        %v1644 = vrcp.pop %v1628
        %v1645 = vmul.f32 %v1628, %v1644
        %v1646 = vsub.f32 1.0, %v1645
        %v1647 = vmul.f32 %v1644, %v1646
        %v1648 = vadd.f32 %v1644, %v1647
        %vm1649 = vweird.f32 %v1628
        %vm1650 = vweird.f32 %v1644
        %vm1651 = vmor %vm1649, %vm1650
        %v1652 = vsel %vm1651, %v1644, %v1648
        %v1653 = vand.u32 2147483647, %v1628
        %vm1654 = vcmp.eq.f32.partialorder %v1653, 8.507059e+37
        %v1655 = vand.u32 %v1628, 2147483648
        %v1656 = vor.u32 1.1754944e-38, %v1655
        %v1657 = vsel %vm1654, %v1656, %v1652
        %v1658 = vmul.f32 1.0, %v1657
        %v1659 = vmul.f32 %v1615, %v1643
        %v1660 = vmul.f32 %v1617, %v1658
        %v1661 = vpack.c.bf16 %v1660, %v1659
        %v1662 = vld [vmem:[%s757] sm:$0xf]
        %v1663 = vld [vmem:[%s757 + $0x4] sm:$0xf]
        %v1664 = vld [vmem:[%s757 + $0x8] sm:$0xf]
        %v1665 = vld [vmem:[%s757 + $0xc] sm:$0xf]
        %v1666 = vld [vmem:[%s757 + $0x10] sm:$0xf]
        %v1667 = vld [vmem:[%s757 + $0x14] sm:$0xf]
        %v1668 = vld [vmem:[%s757 + $0x18] sm:$0xf]
        %v1669 = vld [vmem:[%s757 + $0x1c] sm:$0xf]
        %v1670 = vld [vmem:[%s757 + $0x20] sm:$0xf]
        %v1671 = vld [vmem:[%s757 + $0x24] sm:$0xf]
        %v1672 = vld [vmem:[%s757 + $0x28] sm:$0xf]
        %v1673 = vld [vmem:[%s757 + $0x2c] sm:$0xf]
        %v1674 = vld [vmem:[%s757 + $0x30] sm:$0xf]
        %v1675 = vld [vmem:[%s757 + $0x34] sm:$0xf]
        %v1676 = vld [vmem:[%s757 + $0x38] sm:$0xf]
        %v1677 = vld [vmem:[%s757 + $0x3c] sm:$0xf]
        %v1678 = vld [vmem:[%s760] sm:$0x1]
        %v1680 = vperm.slane %v1678, 0
        %v1698 = vunpack.c.l.b16 %v1662
        %v1699 = vunpack.c.l.b16 %v1663
        %v1700 = vunpack.c.l.b16 %v1664
        %v1701 = vunpack.c.l.b16 %v1665
        %v1702 = vunpack.c.l.b16 %v1666
        %v1703 = vunpack.c.l.b16 %v1667
        %v1704 = vunpack.c.l.b16 %v1668
        %v1705 = vunpack.c.l.b16 %v1669
        %v1706 = vunpack.c.l.b16 %v1670
        %v1707 = vunpack.c.l.b16 %v1671
        %v1708 = vunpack.c.l.b16 %v1672
        %v1709 = vunpack.c.l.b16 %v1673
        %v1710 = vunpack.c.l.b16 %v1674
        %v1711 = vunpack.c.l.b16 %v1675
        %v1712 = vunpack.c.l.b16 %v1676
        %v1713 = vunpack.c.l.b16 %v1677
        %v1714 = vpack.c.b16 %v1699, %v1698
        %v1715 = vpack.c.b16 %v1701, %v1700
        %v1716 = vpack.c.b16 %v1703, %v1702
        %v1717 = vpack.c.b16 %v1705, %v1704
        %v1718 = vpack.c.b16 %v1707, %v1706
        %v1719 = vpack.c.b16 %v1709, %v1708
        %v1720 = vpack.c.b16 %v1711, %v1710
        %v1721 = vpack.c.b16 %v1713, %v1712
        %1730 = vmatpush.bf16.msra.mxu0 %v1721
        %1731 = vmatpush.bf16.msra.mxu0 %v1720
        %1732 = vmatpush.bf16.msra.mxu0 %v1719
        %1733 = vmatpush.bf16.msra.mxu0 %v1718
        %1734 = vmatpush.bf16.msra.mxu0 %v1717
        %1735 = vmatpush.bf16.msra.mxu0 %v1716
        %1736 = vmatpush.bf16.msra.mxu0 %v1715
        %1737 = vmatpush.bf16.msra.mxu0 %v1714
        %1738 = vmatmul.bf16.gmra.mxu0 %v1661
        %v1739 = vpop.f32.mrf.mxu0
        %v1740 = vadd.f32 %v1680, %v1739
        %v1741 = vpop.f32.mrf.mxu0
        %v1742 = vadd.f32 %v1680, %v1741
        %1743 = vdwg.mxu0
        %v1744 = vadd.f32 %v1523, %v1740
        %v1745 = vadd.f32 %v1524, %v1742
        %1746 = vst.msk [vmem:[#allocation2] sm:$0xff] %vm779, %v1744
        %1747 = vst.msk [vmem:[#allocation2 + $0x8] sm:$0xff] %vm779, %v1745
        %p1748 = scmp.eq.s32.totalorder %s31, 1
        // Predicated region
        $region101: #{tpu_custom_call.1} parent=95 // pred_check
          %p1749 = pneg %p1748
        $region102: #{tpu_custom_call.1} parent=95 // pred_check_branch
          %1751 = sbr.rel (%p1749) target = $region104
        $region103: #{tpu_custom_call.1} parent=95 // pred_region
          %v1752 = vld [vmem:[%s3] sm:$0x3]
          %v1754 = vsel %vm886, %v1752, 0
          %1756 = vmatpush.msra.mxu0 0.0
          %1757 = vmatpush.msra.mxu0 0.0
          %1758 = vmatpush.msra.mxu0 0.0
          %1759 = vmatpush.msra.mxu0 0.0
          %1760 = vmatpush.msra.mxu0 0.0
          %1761 = vmatpush.msra.mxu0 0.0
          %1762 = vmatpush.msra.mxu0 0.0
          %1763 = vmatpush.msra.mxu0 0.0
          %1764 = vmatpush.msra.mxu0 0.0
          %1765 = vmatpush.msra.mxu0 0.0
          %1766 = vmatpush.msra.mxu0 0.0
          %1767 = vmatpush.msra.mxu0 0.0
          %1768 = vmatpush.msra.mxu0 0.0
          %1769 = vmatpush.msra.mxu0 0.0
          %1770 = vmatpush.msra.mxu0 0.0
          %1771 = vmatpush.msra.mxu0 %v1744
          %1772 = vmatmul.f32.gmra.mxu0 %v1754
          %v1773 = vpop.f32.mrf.mxu0
          %v1774 = vadd.f32 0.0, %v1773
          %1775 = vdwg.mxu0
          %v1776 = vrot.slane %v1752, 1
          %v1777 = vsel %vm886, %v1776, 0
          %1779 = vmatpush.msra.mxu0 0.0
          %1780 = vmatpush.msra.mxu0 0.0
          %1781 = vmatpush.msra.mxu0 0.0
          %1782 = vmatpush.msra.mxu0 0.0
          %1783 = vmatpush.msra.mxu0 0.0
          %1784 = vmatpush.msra.mxu0 0.0
          %1785 = vmatpush.msra.mxu0 0.0
          %1786 = vmatpush.msra.mxu0 0.0
          %1787 = vmatpush.msra.mxu0 0.0
          %1788 = vmatpush.msra.mxu0 0.0
          %1789 = vmatpush.msra.mxu0 0.0
          %1790 = vmatpush.msra.mxu0 0.0
          %1791 = vmatpush.msra.mxu0 0.0
          %1792 = vmatpush.msra.mxu0 0.0
          %1793 = vmatpush.msra.mxu0 0.0
          %1794 = vmatpush.msra.mxu0 %v1745
          %1795 = vmatmul.f32.gmra.mxu0 %v1777
          %v1796 = vpop.f32.mrf.mxu0
          %v1797 = vadd.f32 0.0, %v1796
          %1798 = vdwg.mxu0
          %v1800 = vrot.slane %v1797, 7
          %vm1802 = vcmask 1040384
          %v1803 = vsel %vm1802, %v1774, %v1800
          %v1804 = vld [vmem:[%s16] sm:$0x1]
          %v1805 = vld [vmem:[%s17] sm:$0x1]
          %vm1806 = vcmask 254976
          %v1807 = vsel %vm1806, %v1803, 0.0
          %1808 = vadd.xlane.f32.xlu0 %v1807
          %v1809 = vpop.xlane.xlu0 %1808
          %v1810 = vmul.f32 %v1809, %v792
          %v1811 = vsub.f32 %v1803, %v1810
          %v1812 = vmul.f32 %v1811, %v1811
          %v1813 = vsel %vm1806, %v1812, 0.0
          %1814 = vadd.xlane.f32.xlu0 %v1813
          %v1815 = vpop.xlane.xlu0 %1814
          %v1816 = vmul.f32 %v1815, %v792
          %v1817 = vadd.f32 %v1816, 1e-05
          %v1818 = vrsqrt.pop %v1817
          %v1819 = vmul.f32 %v1818, %v1817
          %v1820 = vmul.f32 %v1819, %v1818
          %v1821 = vmul.f32 0.5, %v1820
          %v1822 = vsub.f32 1.5, %v1821
          %v1823 = vmul.f32 %v1818, %v1822
          %vm1824 = vweird.f32 %v1817
          %vm1825 = vweird.f32 %v1818
          %vm1826 = vmor %vm1824, %vm1825
          %v1827 = vsel %vm1826, %v1818, %v1823
          %v1828 = vmul.f32 %v1811, %v1827
          %v1830 = vperm.slane %v1804, 0
          %v1832 = vmul.f32 %v1828, %v1830
          %v1834 = vperm.slane %v1805, 0
          %v1836 = vadd.f32 %v1832, %v1834
          %v1837 = vpack.c.bf16 %v1836, %v1836
          %v1838 = vld [vmem:[%s18] sm:$0xf]
          %v1839 = vld [vmem:[%s18 + $0x4] sm:$0xf]
          %v1840 = vld [vmem:[%s18 + $0x8] sm:$0xf]
          %v1841 = vld [vmem:[%s18 + $0xc] sm:$0xf]
          %v1846 = vunpack.c.l.b16 %v1838
          %v1847 = vunpack.c.l.b16 %v1839
          %v1848 = vunpack.c.l.b16 %v1840
          %v1849 = vunpack.c.l.b16 %v1841
          %v1850 = vpack.c.b16 %v1847, %v1846
          %v1851 = vpack.c.b16 %v1849, %v1848
          %v1855 = vsel %vm779, %v1837, 0
          %1857 = vmatpush.bf16.msra.mxu0 0
          %1858 = vmatpush.bf16.msra.mxu0 0
          %1859 = vmatpush.bf16.msra.mxu0 0
          %1860 = vmatpush.bf16.msra.mxu0 0
          %1861 = vmatpush.bf16.msra.mxu0 0
          %1862 = vmatpush.bf16.msra.mxu0 0
          %1863 = vmatpush.bf16.msra.mxu0 %v1851
          %1864 = vmatpush.bf16.msra.mxu0 %v1850
          %1865 = vmatmul.bf16.gmra.mxu0 %v1855
          %v1866 = vpop.f32.mrf.mxu0
          %v1867 = vadd.f32 0.0, %v1866
          %v1868 = vpop.f32.mrf.mxu0
          %1869 = vdwg.mxu0
          %vm1870 = vcmask 123904
          %1871 = vst.msk [vmem:[#allocation3] sm:$0x3] %vm1870, %v1867
        $region104: #{tpu_custom_call.1} parent=95 // pred_fallthru
          _
        // Predicated region
        $region105: #{tpu_custom_call.1} parent=95 // pred_check
          %p1872 = pneg %p503
        $region106: #{tpu_custom_call.1} parent=95 // pred_check_branch
          %1874 = sbr.rel (%p1872) target = $region108
        $region107: #{tpu_custom_call.1} parent=95 // pred_region
          %1876 = vsyncadd [#allocation4], 0
          %s1878 = sshll.u32 [#allocation3], 4
          %s1879 = int_to_ptr.vmem [resolvable:$true] %s1878
          %s1880 = sshll.u32 %s19, 4
          %s1881 = int_to_ptr.hbm [resolvable:$true] %s1880
          %1883 = dma.vmem_to_hbm [thread:$0]  %s1879, 32, %s1881, [#allocation4]
        $region108: #{tpu_custom_call.1} parent=95 // pred_fallthru
          _
        // Predicated region
        $region109: #{tpu_custom_call.1} parent=95 // pred_check
          %p1884 = pneg %p503
        $region110: #{tpu_custom_call.1} parent=95 // pred_check_branch
          %1886 = sbr.rel (%p1884) target = $region112
        $region111: #{tpu_custom_call.1} parent=95 // pred_region
          %1888 = dma.done [#allocation4], 32
        $region112: #{tpu_custom_call.1} parent=95 // pred_fallthru
          _
      $region96: #{tpu_custom_call.1} parent=5 // pred_fallthru
        _
      %p1889 = scmp.le.s32.totalorder 2, %s26
      // Predicated region
      $region113: #{tpu_custom_call.1} parent=5 // pred_check
        %p1890 = pneg %p1889
      $region114: #{tpu_custom_call.1} parent=5 // pred_check_branch
        %1892 = sbr.rel (%p1890) target = $region116
      $region115: #{tpu_custom_call.1} parent=5 // pred_region
        %s1893 = ssub.s32 %s26, 2
      $region116: #{tpu_custom_call.1} parent=5 // pred_fallthru
        _
    $region6: #{tpu_custom_call.1} parent=1 // loop_footer
      %s30 = sadd.s32 1, %s26
    $region7: #{tpu_custom_call.1} parent=1 // loop_footer_branch
      %25 = sbr.rel target = $region3
    $region8: #{tpu_custom_call.1} parent=1 // loop_exit
      _
    %1894 = vsyncpa [#allocation4], 1
    %s1895 = scalar_lea.sflag [#allocation4], 1
    %1896 = vsyncpa %s1895, 1

</llo_original>
